<compile_context>
chip_gen: v5e
topology: v5e:2x2
jax: 0.10.0
libtpu: 0.0.40
codegen_flags: <defaults>
</compile_context>

<pallas_src>
import jax
import jax.numpy as jnp
from jax import lax
from jax.experimental import pallas as pl
from jax.experimental.pallas import tpu as pltpu


# ---------------------------------------------------------------------------
# Encoder kernel (gridded over batch): im2col conv3x3 + ReLU + avg pool + FC
# ---------------------------------------------------------------------------
def conv_pool_fc_kernel(xpad_ref, wc_ref, bc_ref, wf_ref, bf_ref, out_ref):
    _, Hp, Wp, Cin = xpad_ref.shape
    H, W = Hp - 2, Wp - 2

    x = xpad_ref[...]                                   # (1, H+2, W+2, Cin)

    # im2col: 9 shifted windows concatenated along channels -> one MXU matmul
    cols = []
    for dy in range(3):
        for dx in range(3):
            cols.append(x[:, dy:dy + H, dx:dx + W, :].reshape(H * W, Cin))
    patches = jnp.concatenate(cols, axis=-1)            # (H*W, 9*Cin)

    conv = jnp.dot(patches.astype(jnp.bfloat16), wc_ref[...],
                   preferred_element_type=jnp.float32) + bc_ref[...]
    conv = jnp.maximum(conv, 0.0)                       # ReLU, (H*W, Cout)

    # Global average pool over spatial positions.
    pooled = jnp.sum(conv, axis=0, keepdims=True) / float(H * W)   # (1, Cout)

    # Linear(Cout -> embed)
    feat = (jnp.dot(pooled.astype(jnp.bfloat16), wf_ref[...],
                    preferred_element_type=jnp.float32) + bf_ref[...])
    out_ref[...] = feat.reshape(1, 1, feat.shape[-1])


# ---------------------------------------------------------------------------
# Decoder kernel: fused BatchNorm1d + fused-gate LSTM with hoisted input /
# vocab projections.  Gate order follows PyTorch nn.LSTM: i, f, g, o.
# ---------------------------------------------------------------------------
def decoder_kernel(feat_ref, emb_ref, g_ref, bb_ref, wih_ref, whh_ref, b_ref,
                   wout_ref, bout_ref, out_ref,
                   xproj_ref, hall_ref, h_ref, c_ref):
    T, B, E = emb_ref.shape
    T1 = T + 1
    Hh = whh_ref.shape[0]
    Vp = wout_ref.shape[-1]

    # ---- BatchNorm1d on encoder features (training-mode batch stats) -------
    feat = feat_ref[...]                                 # (B, E) f32
    mu = jnp.mean(feat, axis=0, keepdims=True)
    var = jnp.mean((feat - mu) ** 2, axis=0, keepdims=True)
    feat_n = g_ref[...] * (feat - mu) * lax.rsqrt(var + 1e-5) + bb_ref[...]

    # ---- Assemble input sequence and hoist the input projection ------------
    seq = jnp.concatenate([feat_n.reshape(1, B, E), emb_ref[...]], axis=0)
    xproj = (jnp.dot(seq.reshape(T1 * B, E).astype(jnp.bfloat16), wih_ref[...],
                     preferred_element_type=jnp.float32)
             + b_ref[...])                               # (T1*B, 4H), incl. bias
    xproj_ref[...] = xproj.reshape(T1, B, 4 * Hh)

    h_ref[...] = jnp.zeros_like(h_ref)
    c_ref[...] = jnp.zeros_like(c_ref)

    whh = whh_ref[...]                                   # (Hh, 4H) bf16

    # ---- Serial recurrence: only h @ Whh + elementwise per step ------------
    def step(t, carry):
        h_t = h_ref[...]
        c_t = c_ref[...]
        gates = xproj_ref[t] + jnp.dot(h_t.astype(jnp.bfloat16), whh,
                                       preferred_element_type=jnp.float32)
        i = jax.nn.sigmoid(gates[:, 0 * Hh:1 * Hh])
        f = jax.nn.sigmoid(gates[:, 1 * Hh:2 * Hh])
        g = jnp.tanh(gates[:, 2 * Hh:3 * Hh])
        o = jax.nn.sigmoid(gates[:, 3 * Hh:4 * Hh])
        c_new = f * c_t + i * g
        h_new = o * jnp.tanh(c_new)
        c_ref[...] = c_new
        h_ref[...] = h_new
        hall_ref[t] = h_new
        return carry

    lax.fori_loop(0, T1, step, 0, unroll=True)

    # ---- Hoisted vocab projection: one (T1*B, H) @ (H, Vp) matmul ----------
    h_all = jnp.transpose(hall_ref[...], (1, 0, 2)).reshape(B * T1, Hh)
    logits = (jnp.dot(h_all.astype(jnp.bfloat16), wout_ref[...],
                      preferred_element_type=jnp.float32) + bout_ref[...])
    out_ref[...] = logits.reshape(B, T1, Vp)             # lane-dense store


# ---------------------------------------------------------------------------
# Parameters (fused LSTM gate layout: [i, f, g, o] blocks along the 4H axis)
# ---------------------------------------------------------------------------
def init_params(key, *, cin, conv_ch, embed, hidden, vocab):
    ks = jax.random.split(key, 10)
    s = 0.1
    return {
        "conv_w": jax.random.normal(ks[0], (3, 3, cin, conv_ch), jnp.float32) * s,
        "conv_b": jax.random.normal(ks[1], (1, conv_ch), jnp.float32) * s,
        "fc_w": jax.random.normal(ks[2], (conv_ch, embed), jnp.float32) * s,
        "fc_b": jax.random.normal(ks[3], (1, embed), jnp.float32) * s,
        "bn_g": jnp.ones((1, embed), jnp.float32),
        "bn_b": jnp.zeros((1, embed), jnp.float32),
        "embed_w": jax.random.normal(ks[4], (vocab, embed), jnp.float32) * s,
        "lstm_wih": jax.random.normal(ks[5], (embed, 4 * hidden), jnp.float32) * s,
        "lstm_whh": jax.random.normal(ks[6], (hidden, 4 * hidden), jnp.float32) * s,
        "lstm_b": jax.random.normal(ks[7], (1, 4 * hidden), jnp.float32) * s,
        "out_w": jax.random.normal(ks[8], (hidden, vocab), jnp.float32) * s,
        "out_b": jax.random.normal(ks[9], (1, vocab), jnp.float32) * s,
    }


# ---------------------------------------------------------------------------
# Wrapper
# ---------------------------------------------------------------------------
def image_captioning_forward(images, captions, params):
    """images: (B, Cin, H, W) float32 (NCHW); captions: (B, T) int32.
    Returns (B, T+1, vocab) float32 (same as the PyTorch model)."""
    B, Cin, H, W = images.shape
    T = captions.shape[1]
    embed = params["fc_w"].shape[1]
    hidden = params["lstm_whh"].shape[0]
    vocab = params["out_w"].shape[1]
    conv_ch = params["conv_b"].shape[-1]

    bf16 = jnp.bfloat16
    vmem = pl.BlockSpec(memory_space=pltpu.MemorySpace.VMEM)

    # ---------------- Encoder ----------------
    x = jnp.transpose(images, (0, 2, 3, 1))                     # NCHW -> NHWC
    xpad = jnp.pad(x, ((0, 0), (1, 1), (1, 1), (0, 0)))
    Hp, Wp = H + 2, W + 2

    wc = params["conv_w"].reshape(9 * Cin, conv_ch).astype(bf16)
    wf = params["fc_w"].astype(bf16)

    def full_spec(arr):
        nd = arr.ndim
        return pl.BlockSpec(arr.shape, lambda b: (0,) * nd)

    feat_raw = pl.pallas_call(
        conv_pool_fc_kernel,
        out_shape=jax.ShapeDtypeStruct((B, 1, embed), jnp.float32),
        grid=(B,),
        in_specs=[pl.BlockSpec((1, Hp, Wp, Cin), lambda b: (b, 0, 0, 0)),
                  full_spec(wc), full_spec(params["conv_b"]),
                  full_spec(wf), full_spec(params["fc_b"])],
        out_specs=pl.BlockSpec((1, 1, embed), lambda b: (b, 0, 0)),
        compiler_params=pltpu.CompilerParams(
            dimension_semantics=("parallel",)),
    )(xpad, wc, params["conv_b"], wf, params["fc_b"])
    feat_raw = feat_raw.reshape(B, embed)

    # ---------------- Decoder ----------------
    # Embedding lookup stays in the wrapper (XLA gather); BN + concat of the
    # feature timestep happen inside the decoder kernel.
    emb = jnp.take(params["embed_w"], captions, axis=0)          # (B, T, E)
    emb_t = jnp.transpose(emb, (1, 0, 2))                        # (T, B, E)
    T1 = T + 1

    # Pad vocab to a multiple of 128 for lane-dense stores; slice afterwards.
    Vp = ((vocab + 127) // 128) * 128
    wout = jnp.pad(params["out_w"], ((0, 0), (0, Vp - vocab))).astype(bf16)
    bout = jnp.pad(params["out_b"], ((0, 0), (0, Vp - vocab)))

    wih = params["lstm_wih"].astype(bf16)                        # (E, 4H)
    whh = params["lstm_whh"].astype(bf16)                        # (H, 4H)
    b = params["lstm_b"]                                         # (1, 4H)

    out = pl.pallas_call(
        decoder_kernel,
        out_shape=jax.ShapeDtypeStruct((B, T1, Vp), jnp.float32),
        in_specs=[vmem] * 9,
        out_specs=vmem,
        scratch_shapes=[pltpu.VMEM((T1, B, 4 * hidden), jnp.float32),  # xproj
                        pltpu.VMEM((T1, B, hidden), jnp.float32),      # h_all
                        pltpu.VMEM((B, hidden), jnp.float32),          # h
                        pltpu.VMEM((B, hidden), jnp.float32)],         # c
    )(feat_raw, emb_t, params["bn_g"], params["bn_b"],
      wih, whh, b, wout, bout)

    return out[:, :, :vocab]                                     # (B, T+1, V)


if __name__ == "__main__":
    B, Cin, H, W = 2, 3, 16, 16
    T = 8
    conv_ch, embed, hidden, vocab = 8, 32, 32, 40

    key = jax.random.PRNGKey(0)
    k_img, k_cap, k_par = jax.random.split(key, 3)

    images = jax.random.normal(k_img, (B, Cin, H, W), jnp.float32)
    captions = jax.random.randint(k_cap, (B, T), 0, vocab, jnp.int32)
    params = init_params(k_par, cin=Cin, conv_ch=conv_ch, embed=embed,
                         hidden=hidden, vocab=vocab)

    out = image_captioning_forward(images, captions, params)
    out = jax.block_until_ready(out)
    assert out.shape == (B, T + 1, vocab), out.shape
    assert bool(jnp.all(jnp.isfinite(out)))
    print("KERNEL_OK")
</pallas_src>

<mosaic_0001>
module attributes {stable_mosaic.version = 11 : i64} {
  func.func @conv_pool_fc_kernel(%arg0: i32, %arg1: memref<1x18x18x3xf32, #tpu.memory_space<vmem>>, %arg2: memref<27x8xbf16, #tpu.memory_space<vmem>>, %arg3: memref<1x8xf32, #tpu.memory_space<vmem>>, %arg4: memref<8x32xbf16, #tpu.memory_space<vmem>>, %arg5: memref<1x32xf32, #tpu.memory_space<vmem>>, %arg6: memref<1x1x32xf32, #tpu.memory_space<vmem>>) attributes {dimension_semantics = [#tpu.dimension_semantics<parallel>], iteration_bounds = array<i64: 2>, scalar_prefetch = 0 : i64, scratch_operands = 0 : i64, tpu.core_type = #tpu.core_type<tc>, window_params = [{transform_indices = @transform_0, window_bounds = array<i64: 1, 18, 18, 3>}, {pipeline_mode = #tpu.pipeline_mode<synchronous>, transform_indices = @transform_1, window_bounds = array<i64: 27, 8>}, {pipeline_mode = #tpu.pipeline_mode<synchronous>, transform_indices = @transform_2, window_bounds = array<i64: 1, 8>}, {pipeline_mode = #tpu.pipeline_mode<synchronous>, transform_indices = @transform_3, window_bounds = array<i64: 8, 32>}, {pipeline_mode = #tpu.pipeline_mode<synchronous>, transform_indices = @transform_4, window_bounds = array<i64: 1, 32>}, {transform_indices = @transform_5, window_bounds = array<i64: 1, 1, 32>}]} {
    %c0 = arith.constant 0 : index
    %c0_0 = arith.constant 0 : index
    %c0_1 = arith.constant 0 : index
    %c0_2 = arith.constant 0 : index
    %0 = vector.load %arg1[%c0, %c0_0, %c0_1, %c0_2] : memref<1x18x18x3xf32, #tpu.memory_space<vmem>>, vector<1x18x18x3xf32>
    %1 = vector.extract_strided_slice %0 {offsets = [0, 0, 0, 0], sizes = [1, 16, 16, 3], strides = [1, 1, 1, 1]} : vector<1x18x18x3xf32> to vector<1x16x16x3xf32>
    %2 = vector.shape_cast %1 : vector<1x16x16x3xf32> to vector<256x3xf32>
    %3 = vector.extract_strided_slice %0 {offsets = [0, 0, 1, 0], sizes = [1, 16, 16, 3], strides = [1, 1, 1, 1]} : vector<1x18x18x3xf32> to vector<1x16x16x3xf32>
    %4 = vector.shape_cast %3 : vector<1x16x16x3xf32> to vector<256x3xf32>
    %5 = vector.extract_strided_slice %0 {offsets = [0, 0, 2, 0], sizes = [1, 16, 16, 3], strides = [1, 1, 1, 1]} : vector<1x18x18x3xf32> to vector<1x16x16x3xf32>
    %6 = vector.shape_cast %5 : vector<1x16x16x3xf32> to vector<256x3xf32>
    %7 = vector.extract_strided_slice %0 {offsets = [0, 1, 0, 0], sizes = [1, 16, 16, 3], strides = [1, 1, 1, 1]} : vector<1x18x18x3xf32> to vector<1x16x16x3xf32>
    %8 = vector.shape_cast %7 : vector<1x16x16x3xf32> to vector<256x3xf32>
    %9 = vector.extract_strided_slice %0 {offsets = [0, 1, 1, 0], sizes = [1, 16, 16, 3], strides = [1, 1, 1, 1]} : vector<1x18x18x3xf32> to vector<1x16x16x3xf32>
    %10 = vector.shape_cast %9 : vector<1x16x16x3xf32> to vector<256x3xf32>
    %11 = vector.extract_strided_slice %0 {offsets = [0, 1, 2, 0], sizes = [1, 16, 16, 3], strides = [1, 1, 1, 1]} : vector<1x18x18x3xf32> to vector<1x16x16x3xf32>
    %12 = vector.shape_cast %11 : vector<1x16x16x3xf32> to vector<256x3xf32>
    %13 = vector.extract_strided_slice %0 {offsets = [0, 2, 0, 0], sizes = [1, 16, 16, 3], strides = [1, 1, 1, 1]} : vector<1x18x18x3xf32> to vector<1x16x16x3xf32>
    %14 = vector.shape_cast %13 : vector<1x16x16x3xf32> to vector<256x3xf32>
    %15 = vector.extract_strided_slice %0 {offsets = [0, 2, 1, 0], sizes = [1, 16, 16, 3], strides = [1, 1, 1, 1]} : vector<1x18x18x3xf32> to vector<1x16x16x3xf32>
    %16 = vector.shape_cast %15 : vector<1x16x16x3xf32> to vector<256x3xf32>
    %17 = vector.extract_strided_slice %0 {offsets = [0, 2, 2, 0], sizes = [1, 16, 16, 3], strides = [1, 1, 1, 1]} : vector<1x18x18x3xf32> to vector<1x16x16x3xf32>
    %18 = vector.shape_cast %17 : vector<1x16x16x3xf32> to vector<256x3xf32>
    %19 = tpu.concatenate %2, %4, %6, %8, %10, %12, %14, %16, %18 in 1 : vector<256x3xf32>, vector<256x3xf32>, vector<256x3xf32>, vector<256x3xf32>, vector<256x3xf32>, vector<256x3xf32>, vector<256x3xf32>, vector<256x3xf32>, vector<256x3xf32> -> vector<256x27xf32>
    %20 = arith.truncf %19 : vector<256x27xf32> to vector<256x27xbf16>
    %c0_3 = arith.constant 0 : index
    %c0_4 = arith.constant 0 : index
    %21 = vector.load %arg2[%c0_3, %c0_4] : memref<27x8xbf16, #tpu.memory_space<vmem>>, vector<27x8xbf16>
    %cst = arith.constant dense<0.000000e+00> : vector<256x8xf32>
    %22 = tpu.matmul %20, %21, %cst {dimension_numbers = #tpu.dot_dimension_numbers<[1], [0], [0], [1], [0, 0, 1, 1], [], []>} : vector<256x27xbf16>, vector<27x8xbf16>, vector<256x8xf32> -> vector<256x8xf32>
    %c0_5 = arith.constant 0 : index
    %c0_6 = arith.constant 0 : index
    %23 = vector.load %arg3[%c0_5, %c0_6] : memref<1x8xf32, #tpu.memory_space<vmem>>, vector<1x8xf32>
    %24 = vector.broadcast %23 : vector<1x8xf32> to vector<256x8xf32>
    %25 = arith.addf %22, %24 : vector<256x8xf32>
    %cst_7 = arith.constant 0.000000e+00 : f32
    %26 = vector.broadcast %cst_7 : f32 to vector<256x8xf32>
    %27 = arith.maximumf %25, %26 : vector<256x8xf32>
    %cst_8 = arith.constant dense<0.000000e+00> : vector<8xf32>
    %28 = vector.multi_reduction <add>, %27, %cst_8 [0] : vector<256x8xf32> to vector<8xf32>
    %29 = vector.shape_cast %28 : vector<8xf32> to vector<1x8xf32>
    %cst_9 = arith.constant 2.560000e+02 : f32
    %30 = vector.broadcast %cst_9 : f32 to vector<1x8xf32>
    %31 = arith.divf %29, %30 : vector<1x8xf32>
    %32 = arith.truncf %31 : vector<1x8xf32> to vector<1x8xbf16>
    %c0_10 = arith.constant 0 : index
    %c0_11 = arith.constant 0 : index
    %33 = vector.load %arg4[%c0_10, %c0_11] : memref<8x32xbf16, #tpu.memory_space<vmem>>, vector<8x32xbf16>
    %cst_12 = arith.constant dense<0.000000e+00> : vector<1x32xf32>
    %34 = tpu.matmul %32, %33, %cst_12 {dimension_numbers = #tpu.dot_dimension_numbers<[1], [0], [0], [1], [0, 0, 1, 1], [], []>} : vector<1x8xbf16>, vector<8x32xbf16>, vector<1x32xf32> -> vector<1x32xf32>
    %c0_13 = arith.constant 0 : index
    %c0_14 = arith.constant 0 : index
    %35 = vector.load %arg5[%c0_13, %c0_14] : memref<1x32xf32, #tpu.memory_space<vmem>>, vector<1x32xf32>
    %36 = arith.addf %34, %35 : vector<1x32xf32>
    %37 = vector.shape_cast %36 : vector<1x32xf32> to vector<1x1x32xf32>
    %c0_15 = arith.constant 0 : index
    %c0_16 = arith.constant 0 : index
    %c0_17 = arith.constant 0 : index
    %38 = vector.load %arg6[%c0_15, %c0_16, %c0_17] : memref<1x1x32xf32, #tpu.memory_space<vmem>>, vector<1x1x32xf32>
    tpu.vector_store %arg6[%c0_15, %c0_16, %c0_17], %37 {strides = array<i32>} : memref<1x1x32xf32, #tpu.memory_space<vmem>>, vector<1x1x32xf32>,
    return
  }
  func.func @transform_0(%arg0: i32) -> (i32, i32, i32, i32) {
    %c0_i32 = arith.constant 0 : i32
    %c0_i32_0 = arith.constant 0 : i32
    %c0_i32_1 = arith.constant 0 : i32
    %c0_i32_2 = arith.constant 0 : i32
    return %arg0, %c0_i32, %c0_i32_0, %c0_i32_1 : i32, i32, i32, i32
  }
  func.func @transform_1(%arg0: i32) -> (i32, i32) {
    %c0_i32 = arith.constant 0 : i32
    %c0_i32_0 = arith.constant 0 : i32
    %c0_i32_1 = arith.constant 0 : i32
    return %c0_i32, %c0_i32_0 : i32, i32
  }
  func.func @transform_2(%arg0: i32) -> (i32, i32) {
    %c0_i32 = arith.constant 0 : i32
    %c0_i32_0 = arith.constant 0 : i32
    %c0_i32_1 = arith.constant 0 : i32
    return %c0_i32, %c0_i32_0 : i32, i32
  }
  func.func @transform_3(%arg0: i32) -> (i32, i32) {
    %c0_i32 = arith.constant 0 : i32
    %c0_i32_0 = arith.constant 0 : i32
    %c0_i32_1 = arith.constant 0 : i32
    return %c0_i32, %c0_i32_0 : i32, i32
  }
  func.func @transform_4(%arg0: i32) -> (i32, i32) {
    %c0_i32 = arith.constant 0 : i32
    %c0_i32_0 = arith.constant 0 : i32
    %c0_i32_1 = arith.constant 0 : i32
    return %c0_i32, %c0_i32_0 : i32, i32
  }
  func.func @transform_5(%arg0: i32) -> (i32, i32, i32) {
    %c0_i32 = arith.constant 0 : i32
    %c0_i32_0 = arith.constant 0 : i32
    %c0_i32_1 = arith.constant 0 : i32
    return %arg0, %c0_i32, %c0_i32_0 : i32, i32, i32
  }
}

</mosaic_0001>

<llo_original>
// kernel: tpu_custom_call.1
$region0: #{tpu_custom_call.1}
  #allocation0 [shape = 'u32[]', space=smem, size = 0x4, offset = 0x4, fixed_abs, tag = 'smem constant byte address 0x4 - core index']
  #allocation1 [shape = 'u32[72,128]{1,0:T(1,128)}', space=vmem, size = 0x9000, scoped, tag = 'internal scratch']
  %s0 = inlined_call_operand.vmem [shape: f32[2,18,18,3], index: 0, kind: input, shape index: {}]
  %s1 = inlined_call_operand.vmem [shape: bf16[27,8], index: 1, kind: input, shape index: {}]
  %s2 = inlined_call_operand.vmem [shape: f32[1,8], index: 2, kind: input, shape index: {}]
  %s3 = inlined_call_operand.vmem [shape: bf16[8,32], index: 3, kind: input, shape index: {}]
  %s4 = inlined_call_operand.vmem [shape: f32[1,32], index: 4, kind: input, shape index: {}]
  %s5 = inlined_call_operand.hbm [shape: f32[2,1,32], index: 5, kind: output, shape index: {}]
  %s6 = sld [smem:[#allocation0]]
  $region53: #{tpu_custom_call.1} parent=0
    _
  %s8 = ssub.s32 1, %s6
  %s9 = scalar_select 0, %s8, %s6
  $region1: #{tpu_custom_call.1} parent=0
    #allocation2 [shape = 'u8[1024]{0}', space=vmem, size = 0x400, scoped, tag = 'output window, operand 0']
    #allocation3 [shape = 's32[2]{0}', space=sflag, size = 0x8, scoped, tag = 'scoped memory for tpu_custom_call.1']
    %10 = vsyncpa [#allocation3], 0
    %s11 = scalar_lea.sflag [#allocation3], 1
    %12 = vsyncpa %s11, 0
    loop: start=0, step=1, limit=4
    $region2: #{tpu_custom_call.1} parent=1 // loop_pre_header
      _
    $region3: #{tpu_custom_call.1} parent=1 // loop_header
      %s14 = sphi 0, %s18
      %p15 = scmp.ge.s32.totalorder %s14, 4
      %s24 = sphi 0, %s26
      %s27 = sphi 0, %s24
      %s28 = sphi 0, %s27
      %s44 = sphi 0, %s28
      %s48 = sphi 0, %s48
      %s50 = sphi 0, %s48
      %s51 = sphi 0, %s50
      %s65 = sphi 0, %s51
      %s69 = sphi 0, %s69
      %s71 = sphi 0, %s69
      %s72 = sphi 0, %s71
      %s86 = sphi 0, %s72
      %s90 = sphi 0, %s90
      %s92 = sphi 0, %s90
      %s93 = sphi 0, %s92
      %s107 = sphi 0, %s93
      %s111 = sphi 0, %s111
      %s113 = sphi 0, %s111
      %s114 = sphi 0, %s113
      %s128 = sphi 0, %s114
      %s134 = sphi 0, %s136
      %s137 = sphi 0, %s134
      %s138 = sphi 0, %s137
      %s154 = sphi 0, %s138
    $region4: #{tpu_custom_call.1} parent=1 // loop_header_branch
      %17 = sbr.rel (%p15) target = $region8
    $region5: #{tpu_custom_call.1} parent=1 // loop_body
      %s19 = ssub.s32 %s14, 1
      %s20 = ssub.s32 %s14, 2
      %s21 = sadd.s32 %s14, 1
      %s22 = ssub.s32 %s14, %s21
      %p23 = scmp.eq.s32.totalorder %s22, 0
      %s25 = sadd.s32 %s24, 1
      %s26 = scalar_select %p23, %s24, %s25
      %p29 = pneg %p23
      %p30 = scmp.eq.s32.totalorder %s14, 1
      %p31 = por %p29, %p30
      %p32 = scmp.ne.s32.totalorder %s24, %s27
      %p33 = scmp.eq.s32.totalorder %s14, 0
      %p34 = por %p32, %p33
      %p35 = scmp.ne.s32.totalorder %s24, %s27
      %p36 = scmp.eq.s32.totalorder %s19, 1
      %p37 = por %p35, %p36
      %p38 = scmp.ne.s32.totalorder %s27, %s28
      %p39 = scmp.eq.s32.totalorder %s19, 0
      %p40 = por %p38, %p39
      %p41 = scmp.ne.s32.totalorder %s27, %s28
      %p42 = scmp.eq.s32.totalorder %s20, 1
      %p43 = por %p41, %p42
      %p45 = scmp.ne.s32.totalorder %s28, %s44
      %p46 = scmp.eq.s32.totalorder %s20, 0
      %p47 = por %p45, %p46
      %s49 = sadd.s32 %s48, 1
      %p52 = scmp.eq.s32.totalorder %s14, 1
      %p53 = scmp.ne.s32.totalorder %s48, %s50
      %p54 = scmp.eq.s32.totalorder %s14, 0
      %p55 = por %p53, %p54
      %p56 = scmp.ne.s32.totalorder %s48, %s50
      %p57 = scmp.eq.s32.totalorder %s19, 1
      %p58 = por %p56, %p57
      %p59 = scmp.ne.s32.totalorder %s50, %s51
      %p60 = scmp.eq.s32.totalorder %s19, 0
      %p61 = por %p59, %p60
      %p62 = scmp.ne.s32.totalorder %s50, %s51
      %p63 = scmp.eq.s32.totalorder %s20, 1
      %p64 = por %p62, %p63
      %p66 = scmp.ne.s32.totalorder %s51, %s65
      %p67 = scmp.eq.s32.totalorder %s20, 0
      %p68 = por %p66, %p67
      %s70 = sadd.s32 %s69, 1
      %p73 = scmp.eq.s32.totalorder %s14, 1
      %p74 = scmp.ne.s32.totalorder %s69, %s71
      %p75 = scmp.eq.s32.totalorder %s14, 0
      %p76 = por %p74, %p75
      %p77 = scmp.ne.s32.totalorder %s69, %s71
      %p78 = scmp.eq.s32.totalorder %s19, 1
      %p79 = por %p77, %p78
      %p80 = scmp.ne.s32.totalorder %s71, %s72
      %p81 = scmp.eq.s32.totalorder %s19, 0
      %p82 = por %p80, %p81
      %p83 = scmp.ne.s32.totalorder %s71, %s72
      %p84 = scmp.eq.s32.totalorder %s20, 1
      %p85 = por %p83, %p84
      %p87 = scmp.ne.s32.totalorder %s72, %s86
      %p88 = scmp.eq.s32.totalorder %s20, 0
      %p89 = por %p87, %p88
      %s91 = sadd.s32 %s90, 1
      %p94 = scmp.eq.s32.totalorder %s14, 1
      %p95 = scmp.ne.s32.totalorder %s90, %s92
      %p96 = scmp.eq.s32.totalorder %s14, 0
      %p97 = por %p95, %p96
      %p98 = scmp.ne.s32.totalorder %s90, %s92
      %p99 = scmp.eq.s32.totalorder %s19, 1
      %p100 = por %p98, %p99
      %p101 = scmp.ne.s32.totalorder %s92, %s93
      %p102 = scmp.eq.s32.totalorder %s19, 0
      %p103 = por %p101, %p102
      %p104 = scmp.ne.s32.totalorder %s92, %s93
      %p105 = scmp.eq.s32.totalorder %s20, 1
      %p106 = por %p104, %p105
      %p108 = scmp.ne.s32.totalorder %s93, %s107
      %p109 = scmp.eq.s32.totalorder %s20, 0
      %p110 = por %p108, %p109
      %s112 = sadd.s32 %s111, 1
      %p115 = scmp.eq.s32.totalorder %s14, 1
      %p116 = scmp.ne.s32.totalorder %s111, %s113
      %p117 = scmp.eq.s32.totalorder %s14, 0
      %p118 = por %p116, %p117
      %p119 = scmp.ne.s32.totalorder %s111, %s113
      %p120 = scmp.eq.s32.totalorder %s19, 1
      %p121 = por %p119, %p120
      %p122 = scmp.ne.s32.totalorder %s113, %s114
      %p123 = scmp.eq.s32.totalorder %s19, 0
      %p124 = por %p122, %p123
      %p125 = scmp.ne.s32.totalorder %s113, %s114
      %p126 = scmp.eq.s32.totalorder %s20, 1
      %p127 = por %p125, %p126
      %p129 = scmp.ne.s32.totalorder %s114, %s128
      %p130 = scmp.eq.s32.totalorder %s20, 0
      %p131 = por %p129, %p130
      %s132 = ssub.s32 %s14, %s21
      %p133 = scmp.eq.s32.totalorder %s132, 0
      %s135 = sadd.s32 %s134, 1
      %s136 = scalar_select %p133, %s134, %s135
      %p139 = pneg %p133
      %p140 = scmp.eq.s32.totalorder %s14, 1
      %p141 = por %p139, %p140
      %p142 = scmp.ne.s32.totalorder %s134, %s137
      %p143 = scmp.eq.s32.totalorder %s14, 0
      %p144 = por %p142, %p143
      %p145 = scmp.ne.s32.totalorder %s134, %s137
      %p146 = scmp.eq.s32.totalorder %s19, 1
      %p147 = por %p145, %p146
      %p148 = scmp.ne.s32.totalorder %s137, %s138
      %p149 = scmp.eq.s32.totalorder %s19, 0
      %p150 = por %p148, %p149
      %p151 = scmp.ne.s32.totalorder %s137, %s138
      %p152 = scmp.eq.s32.totalorder %s20, 1
      %p153 = por %p151, %p152
      %p155 = scmp.ne.s32.totalorder %s138, %s154
      %p156 = scmp.eq.s32.totalorder %s20, 0
      %p157 = por %p155, %p156
      %p158 = scmp.le.s32.totalorder 1, %s14
      %p159 = scmp.lt.s32.totalorder %s14, 3
      %p160 = pnand %p158, %p159
      %p161 = pneg %p160
      // Predicated region
      $region9: #{tpu_custom_call.1} parent=5 // pred_check
        _
      $region10: #{tpu_custom_call.1} parent=5 // pred_check_branch
        %163 = sbr.rel (%p160) target = $region12
      $region11: #{tpu_custom_call.1} parent=5 // pred_region
        %s164 = ssub.s32 %s14, 1
        // Predicated region
        $region13: #{tpu_custom_call.1} parent=11 // pred_check
          %p165 = pneg %p61
        $region14: #{tpu_custom_call.1} parent=11 // pred_check_branch
          %167 = sbr.rel (%p165) target = $region16
        $region15: #{tpu_custom_call.1} parent=11 // pred_region
          _
        $region16: #{tpu_custom_call.1} parent=11 // pred_fallthru
          _
        // Predicated region
        $region17: #{tpu_custom_call.1} parent=11 // pred_check
          %p168 = pneg %p82
        $region18: #{tpu_custom_call.1} parent=11 // pred_check_branch
          %170 = sbr.rel (%p168) target = $region20
        $region19: #{tpu_custom_call.1} parent=11 // pred_region
          _
        $region20: #{tpu_custom_call.1} parent=11 // pred_fallthru
          _
        // Predicated region
        $region21: #{tpu_custom_call.1} parent=11 // pred_check
          %p171 = pneg %p103
        $region22: #{tpu_custom_call.1} parent=11 // pred_check_branch
          %173 = sbr.rel (%p171) target = $region24
        $region23: #{tpu_custom_call.1} parent=11 // pred_region
          _
        $region24: #{tpu_custom_call.1} parent=11 // pred_fallthru
          _
        // Predicated region
        $region25: #{tpu_custom_call.1} parent=11 // pred_check
          %p174 = pneg %p124
        $region26: #{tpu_custom_call.1} parent=11 // pred_check_branch
          %176 = sbr.rel (%p174) target = $region28
        $region27: #{tpu_custom_call.1} parent=11 // pred_region
          _
        $region28: #{tpu_custom_call.1} parent=11 // pred_fallthru
          _
      $region12: #{tpu_custom_call.1} parent=5 // pred_fallthru
        _
      %p177 = scmp.lt.s32.totalorder %s14, 2
      // Predicated region
      $region29: #{tpu_custom_call.1} parent=5 // pred_check
        %p178 = pneg %p177
      $region30: #{tpu_custom_call.1} parent=5 // pred_check_branch
        %180 = sbr.rel (%p178) target = $region32
      $region31: #{tpu_custom_call.1} parent=5 // pred_region
        // Predicated region
        $region33: #{tpu_custom_call.1} parent=31 // pred_check
          %p181 = pneg %p34
        $region34: #{tpu_custom_call.1} parent=31 // pred_check_branch
          %183 = sbr.rel (%p181) target = $region36
        $region35: #{tpu_custom_call.1} parent=31 // pred_region
          %p184 = scmp.lt.s32.totalorder %s14, 1
          %s185 = scalar_select %p184, %s14, 1
          %s186 = smul.addr %s185, 54
          %s187 = smul.addr %s186, 8
          %s188 = scalar_lea.vmem %s0, %s187
        $region36: #{tpu_custom_call.1} parent=31 // pred_fallthru
          _
      $region32: #{tpu_custom_call.1} parent=5 // pred_fallthru
        _
      %p189 = scmp.le.s32.totalorder 1, %s14
      %p190 = scmp.lt.s32.totalorder %s14, 3
      %p191 = pnand %p189, %p190
      %p192 = pneg %p191
      // Predicated region
      $region37: #{tpu_custom_call.1} parent=5 // pred_check
        _
      $region38: #{tpu_custom_call.1} parent=5 // pred_check_branch
        %194 = sbr.rel (%p191) target = $region40
      $region39: #{tpu_custom_call.1} parent=5 // pred_region
        %s195 = ssub.s32 %s14, 1
        %p196 = scmp.lt.s32.totalorder %s19, 1
        %s197 = scalar_select %p196, %s19, 1
        %s198 = smul.addr %s197, 54
        %s199 = smul.addr %s198, 8
        %s200 = scalar_lea.vmem %s0, %s199
        %p201 = pneg %p40
        %p202 = pneg %p37
        %p203 = pneg %p61
        %p204 = pneg %p58
        %p205 = pneg %p82
        %p206 = pneg %p79
        %p207 = pneg %p103
        %p208 = pneg %p100
        %p209 = pneg %p124
        %p210 = pneg %p121
        %p211 = pneg %p150
        %p212 = pneg %p147
        %s213 = sand.u32 %s137, 1
        %s214 = scalar_lea.sflag [#allocation3], %s213
        %s215 = sand.u32 %s137, 1
        %s216 = scalar_lea.vmem [#allocation2], %s215
        %p217 = scmp.lt.s32.totalorder %s19, 1
        %s218 = scalar_select %p217, %s19, 1
        %s219 = smul.addr %s218, 54
        %s220 = smul.addr %s219, 8
        %s221 = scalar_lea.vmem %s0, %s220
        %v223 = vld [vmem:[%s221] sm:$0xff]
        %v224 = vld [vmem:[%s221 + $0x8] sm:$0xff]
        %v225 = vld [vmem:[%s221 + $0x10] sm:$0x3]
        %v226 = vld [vmem:[%s221 + $0x18] sm:$0xff]
        %v227 = vld [vmem:[%s221 + $0x20] sm:$0xff]
        %v228 = vld [vmem:[%s221 + $0x28] sm:$0x3]
        %v229 = vld [vmem:[%s221 + $0x30] sm:$0xff]
        %v230 = vld [vmem:[%s221 + $0x38] sm:$0xff]
        %v231 = vld [vmem:[%s221 + $0x40] sm:$0x3]
        %v232 = vld [vmem:[%s221 + $0x48] sm:$0xff]
        %v233 = vld [vmem:[%s221 + $0x50] sm:$0xff]
        %v234 = vld [vmem:[%s221 + $0x58] sm:$0x3]
        %v235 = vld [vmem:[%s221 + $0x60] sm:$0xff]
        %v236 = vld [vmem:[%s221 + $0x68] sm:$0xff]
        %v237 = vld [vmem:[%s221 + $0x70] sm:$0x3]
        %v238 = vld [vmem:[%s221 + $0x78] sm:$0xff]
        %v239 = vld [vmem:[%s221 + $0x80] sm:$0xff]
        %v240 = vld [vmem:[%s221 + $0x88] sm:$0x3]
        %v241 = vld [vmem:[%s221 + $0x90] sm:$0xff]
        %v242 = vld [vmem:[%s221 + $0x98] sm:$0xff]
        %v243 = vld [vmem:[%s221 + $0xa0] sm:$0x3]
        %v244 = vld [vmem:[%s221 + $0xa8] sm:$0xff]
        %v245 = vld [vmem:[%s221 + $0xb0] sm:$0xff]
        %v246 = vld [vmem:[%s221 + $0xb8] sm:$0x3]
        %v247 = vld [vmem:[%s221 + $0xc0] sm:$0xff]
        %v248 = vld [vmem:[%s221 + $0xc8] sm:$0xff]
        %v249 = vld [vmem:[%s221 + $0xd0] sm:$0x3]
        %v250 = vld [vmem:[%s221 + $0xd8] sm:$0xff]
        %v251 = vld [vmem:[%s221 + $0xe0] sm:$0xff]
        %v252 = vld [vmem:[%s221 + $0xe8] sm:$0x3]
        %v253 = vld [vmem:[%s221 + $0xf0] sm:$0xff]
        %v254 = vld [vmem:[%s221 + $0xf8] sm:$0xff]
        %v255 = vld [vmem:[%s221 + $0x100] sm:$0x3]
        %v256 = vld [vmem:[%s221 + $0x108] sm:$0xff]
        %v257 = vld [vmem:[%s221 + $0x110] sm:$0xff]
        %v258 = vld [vmem:[%s221 + $0x118] sm:$0x3]
        %v259 = vld [vmem:[%s221 + $0x120] sm:$0xff]
        %v260 = vld [vmem:[%s221 + $0x128] sm:$0xff]
        %v261 = vld [vmem:[%s221 + $0x130] sm:$0x3]
        %v262 = vld [vmem:[%s221 + $0x138] sm:$0xff]
        %v263 = vld [vmem:[%s221 + $0x140] sm:$0xff]
        %v264 = vld [vmem:[%s221 + $0x148] sm:$0x3]
        %v265 = vld [vmem:[%s221 + $0x150] sm:$0xff]
        %v266 = vld [vmem:[%s221 + $0x158] sm:$0xff]
        %v267 = vld [vmem:[%s221 + $0x160] sm:$0x3]
        %v268 = vld [vmem:[%s221 + $0x168] sm:$0xff]
        %v269 = vld [vmem:[%s221 + $0x170] sm:$0xff]
        %v270 = vld [vmem:[%s221 + $0x178] sm:$0x3]
        %v271 = vld [vmem:[%s221 + $0x180] sm:$0xff]
        %v272 = vld [vmem:[%s221 + $0x188] sm:$0xff]
        %v273 = vld [vmem:[%s221 + $0x190] sm:$0x3]
        %v274 = vld [vmem:[%s221 + $0x198] sm:$0xff]
        %v275 = vld [vmem:[%s221 + $0x1a0] sm:$0xff]
        %v276 = vld [vmem:[%s221 + $0x1a8] sm:$0x3]
        %vm325 = vcmask 1046528
        %v326 = vrot.slane %v223, 1
        %v327 = vrot.slane %v224, 1
        %v328 = vsel %vm325, %v326, %v327
        %v329 = vrot.slane %v225, 1
        %v330 = vsel %vm325, %v327, %v329
        %v331 = vrot.slane %v226, 1
        %v332 = vrot.slane %v227, 1
        %v333 = vsel %vm325, %v331, %v332
        %v334 = vrot.slane %v228, 1
        %v335 = vsel %vm325, %v332, %v334
        %v336 = vrot.slane %v229, 1
        %v337 = vrot.slane %v230, 1
        %v338 = vsel %vm325, %v336, %v337
        %v339 = vrot.slane %v231, 1
        %v340 = vsel %vm325, %v337, %v339
        %v341 = vrot.slane %v232, 1
        %v342 = vrot.slane %v233, 1
        %v343 = vsel %vm325, %v341, %v342
        %v344 = vrot.slane %v234, 1
        %v345 = vsel %vm325, %v342, %v344
        %v346 = vrot.slane %v235, 1
        %v347 = vrot.slane %v236, 1
        %v348 = vsel %vm325, %v346, %v347
        %v349 = vrot.slane %v237, 1
        %v350 = vsel %vm325, %v347, %v349
        %v351 = vrot.slane %v238, 1
        %v352 = vrot.slane %v239, 1
        %v353 = vsel %vm325, %v351, %v352
        %v354 = vrot.slane %v240, 1
        %v355 = vsel %vm325, %v352, %v354
        %v356 = vrot.slane %v241, 1
        %v357 = vrot.slane %v242, 1
        %v358 = vsel %vm325, %v356, %v357
        %v359 = vrot.slane %v243, 1
        %v360 = vsel %vm325, %v357, %v359
        %v361 = vrot.slane %v244, 1
        %v362 = vrot.slane %v245, 1
        %v363 = vsel %vm325, %v361, %v362
        %v364 = vrot.slane %v246, 1
        %v365 = vsel %vm325, %v362, %v364
        %v366 = vrot.slane %v247, 1
        %v367 = vrot.slane %v248, 1
        %v368 = vsel %vm325, %v366, %v367
        %v369 = vrot.slane %v249, 1
        %v370 = vsel %vm325, %v367, %v369
        %v371 = vrot.slane %v250, 1
        %v372 = vrot.slane %v251, 1
        %v373 = vsel %vm325, %v371, %v372
        %v374 = vrot.slane %v252, 1
        %v375 = vsel %vm325, %v372, %v374
        %v376 = vrot.slane %v253, 1
        %v377 = vrot.slane %v254, 1
        %v378 = vsel %vm325, %v376, %v377
        %v379 = vrot.slane %v255, 1
        %v380 = vsel %vm325, %v377, %v379
        %v381 = vrot.slane %v256, 1
        %v382 = vrot.slane %v257, 1
        %v383 = vsel %vm325, %v381, %v382
        %v384 = vrot.slane %v258, 1
        %v385 = vsel %vm325, %v382, %v384
        %v386 = vrot.slane %v259, 1
        %v387 = vrot.slane %v260, 1
        %v388 = vsel %vm325, %v386, %v387
        %v389 = vrot.slane %v261, 1
        %v390 = vsel %vm325, %v387, %v389
        %v391 = vrot.slane %v262, 1
        %v392 = vrot.slane %v263, 1
        %v393 = vsel %vm325, %v391, %v392
        %v394 = vrot.slane %v264, 1
        %v395 = vsel %vm325, %v392, %v394
        %v396 = vrot.slane %v265, 1
        %v397 = vrot.slane %v266, 1
        %v398 = vsel %vm325, %v396, %v397
        %v399 = vrot.slane %v267, 1
        %v400 = vsel %vm325, %v397, %v399
        %v401 = vrot.slane %v268, 1
        %v402 = vrot.slane %v269, 1
        %v403 = vsel %vm325, %v401, %v402
        %v404 = vrot.slane %v270, 1
        %v405 = vsel %vm325, %v402, %v404
        %vm406 = vcmask 1045504
        %v407 = vrot.slane %v223, 2
        %v408 = vrot.slane %v224, 2
        %v409 = vsel %vm406, %v407, %v408
        %v410 = vrot.slane %v225, 2
        %v411 = vsel %vm406, %v408, %v410
        %v412 = vrot.slane %v226, 2
        %v413 = vrot.slane %v227, 2
        %v414 = vsel %vm406, %v412, %v413
        %v415 = vrot.slane %v228, 2
        %v416 = vsel %vm406, %v413, %v415
        %v417 = vrot.slane %v229, 2
        %v418 = vrot.slane %v230, 2
        %v419 = vsel %vm406, %v417, %v418
        %v420 = vrot.slane %v231, 2
        %v421 = vsel %vm406, %v418, %v420
        %v422 = vrot.slane %v232, 2
        %v423 = vrot.slane %v233, 2
        %v424 = vsel %vm406, %v422, %v423
        %v425 = vrot.slane %v234, 2
        %v426 = vsel %vm406, %v423, %v425
        %v427 = vrot.slane %v235, 2
        %v428 = vrot.slane %v236, 2
        %v429 = vsel %vm406, %v427, %v428
        %v430 = vrot.slane %v237, 2
        %v431 = vsel %vm406, %v428, %v430
        %v432 = vrot.slane %v238, 2
        %v433 = vrot.slane %v239, 2
        %v434 = vsel %vm406, %v432, %v433
        %v435 = vrot.slane %v240, 2
        %v436 = vsel %vm406, %v433, %v435
        %v437 = vrot.slane %v241, 2
        %v438 = vrot.slane %v242, 2
        %v439 = vsel %vm406, %v437, %v438
        %v440 = vrot.slane %v243, 2
        %v441 = vsel %vm406, %v438, %v440
        %v442 = vrot.slane %v244, 2
        %v443 = vrot.slane %v245, 2
        %v444 = vsel %vm406, %v442, %v443
        %v445 = vrot.slane %v246, 2
        %v446 = vsel %vm406, %v443, %v445
        %v447 = vrot.slane %v247, 2
        %v448 = vrot.slane %v248, 2
        %v449 = vsel %vm406, %v447, %v448
        %v450 = vrot.slane %v249, 2
        %v451 = vsel %vm406, %v448, %v450
        %v452 = vrot.slane %v250, 2
        %v453 = vrot.slane %v251, 2
        %v454 = vsel %vm406, %v452, %v453
        %v455 = vrot.slane %v252, 2
        %v456 = vsel %vm406, %v453, %v455
        %v457 = vrot.slane %v253, 2
        %v458 = vrot.slane %v254, 2
        %v459 = vsel %vm406, %v457, %v458
        %v460 = vrot.slane %v255, 2
        %v461 = vsel %vm406, %v458, %v460
        %v462 = vrot.slane %v256, 2
        %v463 = vrot.slane %v257, 2
        %v464 = vsel %vm406, %v462, %v463
        %v465 = vrot.slane %v258, 2
        %v466 = vsel %vm406, %v463, %v465
        %v467 = vrot.slane %v259, 2
        %v468 = vrot.slane %v260, 2
        %v469 = vsel %vm406, %v467, %v468
        %v470 = vrot.slane %v261, 2
        %v471 = vsel %vm406, %v468, %v470
        %v472 = vrot.slane %v262, 2
        %v473 = vrot.slane %v263, 2
        %v474 = vsel %vm406, %v472, %v473
        %v475 = vrot.slane %v264, 2
        %v476 = vsel %vm406, %v473, %v475
        %v477 = vrot.slane %v265, 2
        %v478 = vrot.slane %v266, 2
        %v479 = vsel %vm406, %v477, %v478
        %v480 = vrot.slane %v267, 2
        %v481 = vsel %vm406, %v478, %v480
        %v482 = vrot.slane %v268, 2
        %v483 = vrot.slane %v269, 2
        %v484 = vsel %vm406, %v482, %v483
        %v485 = vrot.slane %v270, 2
        %v486 = vsel %vm406, %v483, %v485
        %v490 = vrot.slane %v271, 1
        %v491 = vrot.slane %v272, 1
        %v492 = vsel %vm325, %v490, %v491
        %v493 = vrot.slane %v273, 1
        %v494 = vsel %vm325, %v491, %v493
        %v495 = vrot.slane %v271, 2
        %v496 = vrot.slane %v272, 2
        %v497 = vsel %vm406, %v495, %v496
        %v498 = vrot.slane %v273, 2
        %v499 = vsel %vm406, %v496, %v498
        %v503 = vrot.slane %v274, 1
        %v504 = vrot.slane %v275, 1
        %v505 = vsel %vm325, %v503, %v504
        %v506 = vrot.slane %v276, 1
        %v507 = vsel %vm325, %v504, %v506
        %v508 = vrot.slane %v274, 2
        %v509 = vrot.slane %v275, 2
        %v510 = vsel %vm406, %v508, %v509
        %v511 = vrot.slane %v276, 2
        %v512 = vsel %vm406, %v509, %v511
        %513 = vrot.lane.b32.xlu0 %v328, 3
        %v514 = vpop.permute.xlu0 %513
        %515 = vrot.lane.b32.xlu0 %v330, 3
        %v516 = vpop.permute.xlu0 %515
        %517 = vrot.lane.b32.xlu0 %v333, 3
        %v518 = vpop.permute.xlu0 %517
        %519 = vrot.lane.b32.xlu0 %v335, 3
        %v520 = vpop.permute.xlu0 %519
        %521 = vrot.lane.b32.xlu0 %v338, 3
        %v522 = vpop.permute.xlu0 %521
        %523 = vrot.lane.b32.xlu0 %v340, 3
        %v524 = vpop.permute.xlu0 %523
        %525 = vrot.lane.b32.xlu0 %v343, 3
        %v526 = vpop.permute.xlu0 %525
        %527 = vrot.lane.b32.xlu0 %v345, 3
        %v528 = vpop.permute.xlu0 %527
        %529 = vrot.lane.b32.xlu0 %v348, 3
        %v530 = vpop.permute.xlu0 %529
        %531 = vrot.lane.b32.xlu0 %v350, 3
        %v532 = vpop.permute.xlu0 %531
        %533 = vrot.lane.b32.xlu0 %v353, 3
        %v534 = vpop.permute.xlu0 %533
        %535 = vrot.lane.b32.xlu0 %v355, 3
        %v536 = vpop.permute.xlu0 %535
        %537 = vrot.lane.b32.xlu0 %v358, 3
        %v538 = vpop.permute.xlu0 %537
        %539 = vrot.lane.b32.xlu0 %v360, 3
        %v540 = vpop.permute.xlu0 %539
        %541 = vrot.lane.b32.xlu0 %v363, 3
        %v542 = vpop.permute.xlu0 %541
        %543 = vrot.lane.b32.xlu0 %v365, 3
        %v544 = vpop.permute.xlu0 %543
        %545 = vrot.lane.b32.xlu0 %v368, 3
        %v546 = vpop.permute.xlu0 %545
        %547 = vrot.lane.b32.xlu0 %v370, 3
        %v548 = vpop.permute.xlu0 %547
        %549 = vrot.lane.b32.xlu0 %v373, 3
        %v550 = vpop.permute.xlu0 %549
        %551 = vrot.lane.b32.xlu0 %v375, 3
        %v552 = vpop.permute.xlu0 %551
        %553 = vrot.lane.b32.xlu0 %v378, 3
        %v554 = vpop.permute.xlu0 %553
        %555 = vrot.lane.b32.xlu0 %v380, 3
        %v556 = vpop.permute.xlu0 %555
        %557 = vrot.lane.b32.xlu0 %v383, 3
        %v558 = vpop.permute.xlu0 %557
        %559 = vrot.lane.b32.xlu0 %v385, 3
        %v560 = vpop.permute.xlu0 %559
        %561 = vrot.lane.b32.xlu0 %v388, 3
        %v562 = vpop.permute.xlu0 %561
        %563 = vrot.lane.b32.xlu0 %v390, 3
        %v564 = vpop.permute.xlu0 %563
        %565 = vrot.lane.b32.xlu0 %v393, 3
        %v566 = vpop.permute.xlu0 %565
        %567 = vrot.lane.b32.xlu0 %v395, 3
        %v568 = vpop.permute.xlu0 %567
        %569 = vrot.lane.b32.xlu0 %v398, 3
        %v570 = vpop.permute.xlu0 %569
        %571 = vrot.lane.b32.xlu0 %v400, 3
        %v572 = vpop.permute.xlu0 %571
        %573 = vrot.lane.b32.xlu0 %v403, 3
        %v574 = vpop.permute.xlu0 %573
        %575 = vrot.lane.b32.xlu0 %v405, 3
        %v576 = vpop.permute.xlu0 %575
        %609 = vrot.lane.b32.xlu0 %v409, 6
        %v610 = vpop.permute.xlu0 %609
        %611 = vrot.lane.b32.xlu0 %v411, 6
        %v612 = vpop.permute.xlu0 %611
        %613 = vrot.lane.b32.xlu0 %v414, 6
        %v614 = vpop.permute.xlu0 %613
        %615 = vrot.lane.b32.xlu0 %v416, 6
        %v616 = vpop.permute.xlu0 %615
        %617 = vrot.lane.b32.xlu0 %v419, 6
        %v618 = vpop.permute.xlu0 %617
        %619 = vrot.lane.b32.xlu0 %v421, 6
        %v620 = vpop.permute.xlu0 %619
        %621 = vrot.lane.b32.xlu0 %v424, 6
        %v622 = vpop.permute.xlu0 %621
        %623 = vrot.lane.b32.xlu0 %v426, 6
        %v624 = vpop.permute.xlu0 %623
        %625 = vrot.lane.b32.xlu0 %v429, 6
        %v626 = vpop.permute.xlu0 %625
        %627 = vrot.lane.b32.xlu0 %v431, 6
        %v628 = vpop.permute.xlu0 %627
        %629 = vrot.lane.b32.xlu0 %v434, 6
        %v630 = vpop.permute.xlu0 %629
        %631 = vrot.lane.b32.xlu0 %v436, 6
        %v632 = vpop.permute.xlu0 %631
        %633 = vrot.lane.b32.xlu0 %v439, 6
        %v634 = vpop.permute.xlu0 %633
        %635 = vrot.lane.b32.xlu0 %v441, 6
        %v636 = vpop.permute.xlu0 %635
        %637 = vrot.lane.b32.xlu0 %v444, 6
        %v638 = vpop.permute.xlu0 %637
        %639 = vrot.lane.b32.xlu0 %v446, 6
        %v640 = vpop.permute.xlu0 %639
        %641 = vrot.lane.b32.xlu0 %v449, 6
        %v642 = vpop.permute.xlu0 %641
        %643 = vrot.lane.b32.xlu0 %v451, 6
        %v644 = vpop.permute.xlu0 %643
        %645 = vrot.lane.b32.xlu0 %v454, 6
        %v646 = vpop.permute.xlu0 %645
        %647 = vrot.lane.b32.xlu0 %v456, 6
        %v648 = vpop.permute.xlu0 %647
        %649 = vrot.lane.b32.xlu0 %v459, 6
        %v650 = vpop.permute.xlu0 %649
        %651 = vrot.lane.b32.xlu0 %v461, 6
        %v652 = vpop.permute.xlu0 %651
        %653 = vrot.lane.b32.xlu0 %v464, 6
        %v654 = vpop.permute.xlu0 %653
        %655 = vrot.lane.b32.xlu0 %v466, 6
        %v656 = vpop.permute.xlu0 %655
        %657 = vrot.lane.b32.xlu0 %v469, 6
        %v658 = vpop.permute.xlu0 %657
        %659 = vrot.lane.b32.xlu0 %v471, 6
        %v660 = vpop.permute.xlu0 %659
        %661 = vrot.lane.b32.xlu0 %v474, 6
        %v662 = vpop.permute.xlu0 %661
        %663 = vrot.lane.b32.xlu0 %v476, 6
        %v664 = vpop.permute.xlu0 %663
        %665 = vrot.lane.b32.xlu0 %v479, 6
        %v666 = vpop.permute.xlu0 %665
        %667 = vrot.lane.b32.xlu0 %v481, 6
        %v668 = vpop.permute.xlu0 %667
        %669 = vrot.lane.b32.xlu0 %v484, 6
        %v670 = vpop.permute.xlu0 %669
        %671 = vrot.lane.b32.xlu0 %v486, 6
        %v672 = vpop.permute.xlu0 %671
        %705 = vrot.lane.b32.xlu0 %v226, 9
        %v706 = vpop.permute.xlu0 %705
        %707 = vrot.lane.b32.xlu0 %v227, 9
        %v708 = vpop.permute.xlu0 %707
        %709 = vrot.lane.b32.xlu0 %v229, 9
        %v710 = vpop.permute.xlu0 %709
        %711 = vrot.lane.b32.xlu0 %v230, 9
        %v712 = vpop.permute.xlu0 %711
        %713 = vrot.lane.b32.xlu0 %v232, 9
        %v714 = vpop.permute.xlu0 %713
        %715 = vrot.lane.b32.xlu0 %v233, 9
        %v716 = vpop.permute.xlu0 %715
        %717 = vrot.lane.b32.xlu0 %v235, 9
        %v718 = vpop.permute.xlu0 %717
        %719 = vrot.lane.b32.xlu0 %v236, 9
        %v720 = vpop.permute.xlu0 %719
        %721 = vrot.lane.b32.xlu0 %v238, 9
        %v722 = vpop.permute.xlu0 %721
        %723 = vrot.lane.b32.xlu0 %v239, 9
        %v724 = vpop.permute.xlu0 %723
        %725 = vrot.lane.b32.xlu0 %v241, 9
        %v726 = vpop.permute.xlu0 %725
        %727 = vrot.lane.b32.xlu0 %v242, 9
        %v728 = vpop.permute.xlu0 %727
        %729 = vrot.lane.b32.xlu0 %v244, 9
        %v730 = vpop.permute.xlu0 %729
        %731 = vrot.lane.b32.xlu0 %v245, 9
        %v732 = vpop.permute.xlu0 %731
        %733 = vrot.lane.b32.xlu0 %v247, 9
        %v734 = vpop.permute.xlu0 %733
        %735 = vrot.lane.b32.xlu0 %v248, 9
        %v736 = vpop.permute.xlu0 %735
        %737 = vrot.lane.b32.xlu0 %v250, 9
        %v738 = vpop.permute.xlu0 %737
        %739 = vrot.lane.b32.xlu0 %v251, 9
        %v740 = vpop.permute.xlu0 %739
        %741 = vrot.lane.b32.xlu0 %v253, 9
        %v742 = vpop.permute.xlu0 %741
        %743 = vrot.lane.b32.xlu0 %v254, 9
        %v744 = vpop.permute.xlu0 %743
        %745 = vrot.lane.b32.xlu0 %v256, 9
        %v746 = vpop.permute.xlu0 %745
        %747 = vrot.lane.b32.xlu0 %v257, 9
        %v748 = vpop.permute.xlu0 %747
        %749 = vrot.lane.b32.xlu0 %v259, 9
        %v750 = vpop.permute.xlu0 %749
        %751 = vrot.lane.b32.xlu0 %v260, 9
        %v752 = vpop.permute.xlu0 %751
        %753 = vrot.lane.b32.xlu0 %v262, 9
        %v754 = vpop.permute.xlu0 %753
        %755 = vrot.lane.b32.xlu0 %v263, 9
        %v756 = vpop.permute.xlu0 %755
        %757 = vrot.lane.b32.xlu0 %v265, 9
        %v758 = vpop.permute.xlu0 %757
        %759 = vrot.lane.b32.xlu0 %v266, 9
        %v760 = vpop.permute.xlu0 %759
        %761 = vrot.lane.b32.xlu0 %v268, 9
        %v762 = vpop.permute.xlu0 %761
        %763 = vrot.lane.b32.xlu0 %v269, 9
        %v764 = vpop.permute.xlu0 %763
        %765 = vrot.lane.b32.xlu0 %v271, 9
        %v766 = vpop.permute.xlu0 %765
        %767 = vrot.lane.b32.xlu0 %v272, 9
        %v768 = vpop.permute.xlu0 %767
        %801 = vrot.lane.b32.xlu0 %v333, 12
        %v802 = vpop.permute.xlu0 %801
        %803 = vrot.lane.b32.xlu0 %v335, 12
        %v804 = vpop.permute.xlu0 %803
        %805 = vrot.lane.b32.xlu0 %v338, 12
        %v806 = vpop.permute.xlu0 %805
        %807 = vrot.lane.b32.xlu0 %v340, 12
        %v808 = vpop.permute.xlu0 %807
        %809 = vrot.lane.b32.xlu0 %v343, 12
        %v810 = vpop.permute.xlu0 %809
        %811 = vrot.lane.b32.xlu0 %v345, 12
        %v812 = vpop.permute.xlu0 %811
        %813 = vrot.lane.b32.xlu0 %v348, 12
        %v814 = vpop.permute.xlu0 %813
        %815 = vrot.lane.b32.xlu0 %v350, 12
        %v816 = vpop.permute.xlu0 %815
        %817 = vrot.lane.b32.xlu0 %v353, 12
        %v818 = vpop.permute.xlu0 %817
        %819 = vrot.lane.b32.xlu0 %v355, 12
        %v820 = vpop.permute.xlu0 %819
        %821 = vrot.lane.b32.xlu0 %v358, 12
        %v822 = vpop.permute.xlu0 %821
        %823 = vrot.lane.b32.xlu0 %v360, 12
        %v824 = vpop.permute.xlu0 %823
        %825 = vrot.lane.b32.xlu0 %v363, 12
        %v826 = vpop.permute.xlu0 %825
        %827 = vrot.lane.b32.xlu0 %v365, 12
        %v828 = vpop.permute.xlu0 %827
        %829 = vrot.lane.b32.xlu0 %v368, 12
        %v830 = vpop.permute.xlu0 %829
        %831 = vrot.lane.b32.xlu0 %v370, 12
        %v832 = vpop.permute.xlu0 %831
        %833 = vrot.lane.b32.xlu0 %v373, 12
        %v834 = vpop.permute.xlu0 %833
        %835 = vrot.lane.b32.xlu0 %v375, 12
        %v836 = vpop.permute.xlu0 %835
        %837 = vrot.lane.b32.xlu0 %v378, 12
        %v838 = vpop.permute.xlu0 %837
        %839 = vrot.lane.b32.xlu0 %v380, 12
        %v840 = vpop.permute.xlu0 %839
        %841 = vrot.lane.b32.xlu0 %v383, 12
        %v842 = vpop.permute.xlu0 %841
        %843 = vrot.lane.b32.xlu0 %v385, 12
        %v844 = vpop.permute.xlu0 %843
        %845 = vrot.lane.b32.xlu0 %v388, 12
        %v846 = vpop.permute.xlu0 %845
        %847 = vrot.lane.b32.xlu0 %v390, 12
        %v848 = vpop.permute.xlu0 %847
        %849 = vrot.lane.b32.xlu0 %v393, 12
        %v850 = vpop.permute.xlu0 %849
        %851 = vrot.lane.b32.xlu0 %v395, 12
        %v852 = vpop.permute.xlu0 %851
        %853 = vrot.lane.b32.xlu0 %v398, 12
        %v854 = vpop.permute.xlu0 %853
        %855 = vrot.lane.b32.xlu0 %v400, 12
        %v856 = vpop.permute.xlu0 %855
        %857 = vrot.lane.b32.xlu0 %v403, 12
        %v858 = vpop.permute.xlu0 %857
        %859 = vrot.lane.b32.xlu0 %v405, 12
        %v860 = vpop.permute.xlu0 %859
        %861 = vrot.lane.b32.xlu0 %v492, 12
        %v862 = vpop.permute.xlu0 %861
        %863 = vrot.lane.b32.xlu0 %v494, 12
        %v864 = vpop.permute.xlu0 %863
        %897 = vrot.lane.b32.xlu0 %v414, 15
        %v898 = vpop.permute.xlu0 %897
        %899 = vrot.lane.b32.xlu0 %v416, 15
        %v900 = vpop.permute.xlu0 %899
        %901 = vrot.lane.b32.xlu0 %v419, 15
        %v902 = vpop.permute.xlu0 %901
        %903 = vrot.lane.b32.xlu0 %v421, 15
        %v904 = vpop.permute.xlu0 %903
        %905 = vrot.lane.b32.xlu0 %v424, 15
        %v906 = vpop.permute.xlu0 %905
        %907 = vrot.lane.b32.xlu0 %v426, 15
        %v908 = vpop.permute.xlu0 %907
        %909 = vrot.lane.b32.xlu0 %v429, 15
        %v910 = vpop.permute.xlu0 %909
        %911 = vrot.lane.b32.xlu0 %v431, 15
        %v912 = vpop.permute.xlu0 %911
        %913 = vrot.lane.b32.xlu0 %v434, 15
        %v914 = vpop.permute.xlu0 %913
        %915 = vrot.lane.b32.xlu0 %v436, 15
        %v916 = vpop.permute.xlu0 %915
        %917 = vrot.lane.b32.xlu0 %v439, 15
        %v918 = vpop.permute.xlu0 %917
        %919 = vrot.lane.b32.xlu0 %v441, 15
        %v920 = vpop.permute.xlu0 %919
        %921 = vrot.lane.b32.xlu0 %v444, 15
        %v922 = vpop.permute.xlu0 %921
        %923 = vrot.lane.b32.xlu0 %v446, 15
        %v924 = vpop.permute.xlu0 %923
        %925 = vrot.lane.b32.xlu0 %v449, 15
        %v926 = vpop.permute.xlu0 %925
        %927 = vrot.lane.b32.xlu0 %v451, 15
        %v928 = vpop.permute.xlu0 %927
        %929 = vrot.lane.b32.xlu0 %v454, 15
        %v930 = vpop.permute.xlu0 %929
        %931 = vrot.lane.b32.xlu0 %v456, 15
        %v932 = vpop.permute.xlu0 %931
        %933 = vrot.lane.b32.xlu0 %v459, 15
        %v934 = vpop.permute.xlu0 %933
        %935 = vrot.lane.b32.xlu0 %v461, 15
        %v936 = vpop.permute.xlu0 %935
        %937 = vrot.lane.b32.xlu0 %v464, 15
        %v938 = vpop.permute.xlu0 %937
        %939 = vrot.lane.b32.xlu0 %v466, 15
        %v940 = vpop.permute.xlu0 %939
        %941 = vrot.lane.b32.xlu0 %v469, 15
        %v942 = vpop.permute.xlu0 %941
        %943 = vrot.lane.b32.xlu0 %v471, 15
        %v944 = vpop.permute.xlu0 %943
        %945 = vrot.lane.b32.xlu0 %v474, 15
        %v946 = vpop.permute.xlu0 %945
        %947 = vrot.lane.b32.xlu0 %v476, 15
        %v948 = vpop.permute.xlu0 %947
        %949 = vrot.lane.b32.xlu0 %v479, 15
        %v950 = vpop.permute.xlu0 %949
        %951 = vrot.lane.b32.xlu0 %v481, 15
        %v952 = vpop.permute.xlu0 %951
        %953 = vrot.lane.b32.xlu0 %v484, 15
        %v954 = vpop.permute.xlu0 %953
        %955 = vrot.lane.b32.xlu0 %v486, 15
        %v956 = vpop.permute.xlu0 %955
        %957 = vrot.lane.b32.xlu0 %v497, 15
        %v958 = vpop.permute.xlu0 %957
        %959 = vrot.lane.b32.xlu0 %v499, 15
        %v960 = vpop.permute.xlu0 %959
        %993 = vrot.lane.b32.xlu0 %v229, 18
        %v994 = vpop.permute.xlu0 %993
        %995 = vrot.lane.b32.xlu0 %v230, 18
        %v996 = vpop.permute.xlu0 %995
        %997 = vrot.lane.b32.xlu0 %v232, 18
        %v998 = vpop.permute.xlu0 %997
        %999 = vrot.lane.b32.xlu0 %v233, 18
        %v1000 = vpop.permute.xlu0 %999
        %1001 = vrot.lane.b32.xlu0 %v235, 18
        %v1002 = vpop.permute.xlu0 %1001
        %1003 = vrot.lane.b32.xlu0 %v236, 18
        %v1004 = vpop.permute.xlu0 %1003
        %1005 = vrot.lane.b32.xlu0 %v238, 18
        %v1006 = vpop.permute.xlu0 %1005
        %1007 = vrot.lane.b32.xlu0 %v239, 18
        %v1008 = vpop.permute.xlu0 %1007
        %1009 = vrot.lane.b32.xlu0 %v241, 18
        %v1010 = vpop.permute.xlu0 %1009
        %1011 = vrot.lane.b32.xlu0 %v242, 18
        %v1012 = vpop.permute.xlu0 %1011
        %1013 = vrot.lane.b32.xlu0 %v244, 18
        %v1014 = vpop.permute.xlu0 %1013
        %1015 = vrot.lane.b32.xlu0 %v245, 18
        %v1016 = vpop.permute.xlu0 %1015
        %1017 = vrot.lane.b32.xlu0 %v247, 18
        %v1018 = vpop.permute.xlu0 %1017
        %1019 = vrot.lane.b32.xlu0 %v248, 18
        %v1020 = vpop.permute.xlu0 %1019
        %1021 = vrot.lane.b32.xlu0 %v250, 18
        %v1022 = vpop.permute.xlu0 %1021
        %1023 = vrot.lane.b32.xlu0 %v251, 18
        %v1024 = vpop.permute.xlu0 %1023
        %1025 = vrot.lane.b32.xlu0 %v253, 18
        %v1026 = vpop.permute.xlu0 %1025
        %1027 = vrot.lane.b32.xlu0 %v254, 18
        %v1028 = vpop.permute.xlu0 %1027
        %1029 = vrot.lane.b32.xlu0 %v256, 18
        %v1030 = vpop.permute.xlu0 %1029
        %1031 = vrot.lane.b32.xlu0 %v257, 18
        %v1032 = vpop.permute.xlu0 %1031
        %1033 = vrot.lane.b32.xlu0 %v259, 18
        %v1034 = vpop.permute.xlu0 %1033
        %1035 = vrot.lane.b32.xlu0 %v260, 18
        %v1036 = vpop.permute.xlu0 %1035
        %1037 = vrot.lane.b32.xlu0 %v262, 18
        %v1038 = vpop.permute.xlu0 %1037
        %1039 = vrot.lane.b32.xlu0 %v263, 18
        %v1040 = vpop.permute.xlu0 %1039
        %1041 = vrot.lane.b32.xlu0 %v265, 18
        %v1042 = vpop.permute.xlu0 %1041
        %1043 = vrot.lane.b32.xlu0 %v266, 18
        %v1044 = vpop.permute.xlu0 %1043
        %1045 = vrot.lane.b32.xlu0 %v268, 18
        %v1046 = vpop.permute.xlu0 %1045
        %1047 = vrot.lane.b32.xlu0 %v269, 18
        %v1048 = vpop.permute.xlu0 %1047
        %1049 = vrot.lane.b32.xlu0 %v271, 18
        %v1050 = vpop.permute.xlu0 %1049
        %1051 = vrot.lane.b32.xlu0 %v272, 18
        %v1052 = vpop.permute.xlu0 %1051
        %1053 = vrot.lane.b32.xlu0 %v274, 18
        %v1054 = vpop.permute.xlu0 %1053
        %1055 = vrot.lane.b32.xlu0 %v275, 18
        %v1056 = vpop.permute.xlu0 %1055
        %1089 = vrot.lane.b32.xlu0 %v338, 21
        %v1090 = vpop.permute.xlu0 %1089
        %1091 = vrot.lane.b32.xlu0 %v340, 21
        %v1092 = vpop.permute.xlu0 %1091
        %1093 = vrot.lane.b32.xlu0 %v343, 21
        %v1094 = vpop.permute.xlu0 %1093
        %1095 = vrot.lane.b32.xlu0 %v345, 21
        %v1096 = vpop.permute.xlu0 %1095
        %1097 = vrot.lane.b32.xlu0 %v348, 21
        %v1098 = vpop.permute.xlu0 %1097
        %1099 = vrot.lane.b32.xlu0 %v350, 21
        %v1100 = vpop.permute.xlu0 %1099
        %1101 = vrot.lane.b32.xlu0 %v353, 21
        %v1102 = vpop.permute.xlu0 %1101
        %1103 = vrot.lane.b32.xlu0 %v355, 21
        %v1104 = vpop.permute.xlu0 %1103
        %1105 = vrot.lane.b32.xlu0 %v358, 21
        %v1106 = vpop.permute.xlu0 %1105
        %1107 = vrot.lane.b32.xlu0 %v360, 21
        %v1108 = vpop.permute.xlu0 %1107
        %1109 = vrot.lane.b32.xlu0 %v363, 21
        %v1110 = vpop.permute.xlu0 %1109
        %1111 = vrot.lane.b32.xlu0 %v365, 21
        %v1112 = vpop.permute.xlu0 %1111
        %1113 = vrot.lane.b32.xlu0 %v368, 21
        %v1114 = vpop.permute.xlu0 %1113
        %1115 = vrot.lane.b32.xlu0 %v370, 21
        %v1116 = vpop.permute.xlu0 %1115
        %1117 = vrot.lane.b32.xlu0 %v373, 21
        %v1118 = vpop.permute.xlu0 %1117
        %1119 = vrot.lane.b32.xlu0 %v375, 21
        %v1120 = vpop.permute.xlu0 %1119
        %1121 = vrot.lane.b32.xlu0 %v378, 21
        %v1122 = vpop.permute.xlu0 %1121
        %1123 = vrot.lane.b32.xlu0 %v380, 21
        %v1124 = vpop.permute.xlu0 %1123
        %1125 = vrot.lane.b32.xlu0 %v383, 21
        %v1126 = vpop.permute.xlu0 %1125
        %1127 = vrot.lane.b32.xlu0 %v385, 21
        %v1128 = vpop.permute.xlu0 %1127
        %1129 = vrot.lane.b32.xlu0 %v388, 21
        %v1130 = vpop.permute.xlu0 %1129
        %1131 = vrot.lane.b32.xlu0 %v390, 21
        %v1132 = vpop.permute.xlu0 %1131
        %1133 = vrot.lane.b32.xlu0 %v393, 21
        %v1134 = vpop.permute.xlu0 %1133
        %1135 = vrot.lane.b32.xlu0 %v395, 21
        %v1136 = vpop.permute.xlu0 %1135
        %1137 = vrot.lane.b32.xlu0 %v398, 21
        %v1138 = vpop.permute.xlu0 %1137
        %1139 = vrot.lane.b32.xlu0 %v400, 21
        %v1140 = vpop.permute.xlu0 %1139
        %1141 = vrot.lane.b32.xlu0 %v403, 21
        %v1142 = vpop.permute.xlu0 %1141
        %1143 = vrot.lane.b32.xlu0 %v405, 21
        %v1144 = vpop.permute.xlu0 %1143
        %1145 = vrot.lane.b32.xlu0 %v492, 21
        %v1146 = vpop.permute.xlu0 %1145
        %1147 = vrot.lane.b32.xlu0 %v494, 21
        %v1148 = vpop.permute.xlu0 %1147
        %1149 = vrot.lane.b32.xlu0 %v505, 21
        %v1150 = vpop.permute.xlu0 %1149
        %1151 = vrot.lane.b32.xlu0 %v507, 21
        %v1152 = vpop.permute.xlu0 %1151
        %1185 = vrot.lane.b32.xlu0 %v419, 24
        %v1186 = vpop.permute.xlu0 %1185
        %1187 = vrot.lane.b32.xlu0 %v421, 24
        %v1188 = vpop.permute.xlu0 %1187
        %1189 = vrot.lane.b32.xlu0 %v424, 24
        %v1190 = vpop.permute.xlu0 %1189
        %1191 = vrot.lane.b32.xlu0 %v426, 24
        %v1192 = vpop.permute.xlu0 %1191
        %1193 = vrot.lane.b32.xlu0 %v429, 24
        %v1194 = vpop.permute.xlu0 %1193
        %1195 = vrot.lane.b32.xlu0 %v431, 24
        %v1196 = vpop.permute.xlu0 %1195
        %1197 = vrot.lane.b32.xlu0 %v434, 24
        %v1198 = vpop.permute.xlu0 %1197
        %1199 = vrot.lane.b32.xlu0 %v436, 24
        %v1200 = vpop.permute.xlu0 %1199
        %1201 = vrot.lane.b32.xlu0 %v439, 24
        %v1202 = vpop.permute.xlu0 %1201
        %1203 = vrot.lane.b32.xlu0 %v441, 24
        %v1204 = vpop.permute.xlu0 %1203
        %1205 = vrot.lane.b32.xlu0 %v444, 24
        %v1206 = vpop.permute.xlu0 %1205
        %1207 = vrot.lane.b32.xlu0 %v446, 24
        %v1208 = vpop.permute.xlu0 %1207
        %1209 = vrot.lane.b32.xlu0 %v449, 24
        %v1210 = vpop.permute.xlu0 %1209
        %1211 = vrot.lane.b32.xlu0 %v451, 24
        %v1212 = vpop.permute.xlu0 %1211
        %1213 = vrot.lane.b32.xlu0 %v454, 24
        %v1214 = vpop.permute.xlu0 %1213
        %1215 = vrot.lane.b32.xlu0 %v456, 24
        %v1216 = vpop.permute.xlu0 %1215
        %1217 = vrot.lane.b32.xlu0 %v459, 24
        %v1218 = vpop.permute.xlu0 %1217
        %1219 = vrot.lane.b32.xlu0 %v461, 24
        %v1220 = vpop.permute.xlu0 %1219
        %1221 = vrot.lane.b32.xlu0 %v464, 24
        %v1222 = vpop.permute.xlu0 %1221
        %1223 = vrot.lane.b32.xlu0 %v466, 24
        %v1224 = vpop.permute.xlu0 %1223
        %1225 = vrot.lane.b32.xlu0 %v469, 24
        %v1226 = vpop.permute.xlu0 %1225
        %1227 = vrot.lane.b32.xlu0 %v471, 24
        %v1228 = vpop.permute.xlu0 %1227
        %1229 = vrot.lane.b32.xlu0 %v474, 24
        %v1230 = vpop.permute.xlu0 %1229
        %1231 = vrot.lane.b32.xlu0 %v476, 24
        %v1232 = vpop.permute.xlu0 %1231
        %1233 = vrot.lane.b32.xlu0 %v479, 24
        %v1234 = vpop.permute.xlu0 %1233
        %1235 = vrot.lane.b32.xlu0 %v481, 24
        %v1236 = vpop.permute.xlu0 %1235
        %1237 = vrot.lane.b32.xlu0 %v484, 24
        %v1238 = vpop.permute.xlu0 %1237
        %1239 = vrot.lane.b32.xlu0 %v486, 24
        %v1240 = vpop.permute.xlu0 %1239
        %1241 = vrot.lane.b32.xlu0 %v497, 24
        %v1242 = vpop.permute.xlu0 %1241
        %1243 = vrot.lane.b32.xlu0 %v499, 24
        %v1244 = vpop.permute.xlu0 %1243
        %1245 = vrot.lane.b32.xlu0 %v510, 24
        %v1246 = vpop.permute.xlu0 %1245
        %1247 = vrot.lane.b32.xlu0 %v512, 24
        %v1248 = vpop.permute.xlu0 %1247
        %vm1281 = vcmask 23552
        %v1282 = vsel %vm1281, %v223, %v514
        %v1283 = vsel %vm1281, %v224, %v516
        %v1284 = vsel %vm1281, %v226, %v518
        %v1285 = vsel %vm1281, %v227, %v520
        %v1286 = vsel %vm1281, %v229, %v522
        %v1287 = vsel %vm1281, %v230, %v524
        %v1288 = vsel %vm1281, %v232, %v526
        %v1289 = vsel %vm1281, %v233, %v528
        %v1290 = vsel %vm1281, %v235, %v530
        %v1291 = vsel %vm1281, %v236, %v532
        %v1292 = vsel %vm1281, %v238, %v534
        %v1293 = vsel %vm1281, %v239, %v536
        %v1294 = vsel %vm1281, %v241, %v538
        %v1295 = vsel %vm1281, %v242, %v540
        %v1296 = vsel %vm1281, %v244, %v542
        %v1297 = vsel %vm1281, %v245, %v544
        %v1298 = vsel %vm1281, %v247, %v546
        %v1299 = vsel %vm1281, %v248, %v548
        %v1300 = vsel %vm1281, %v250, %v550
        %v1301 = vsel %vm1281, %v251, %v552
        %v1302 = vsel %vm1281, %v253, %v554
        %v1303 = vsel %vm1281, %v254, %v556
        %v1304 = vsel %vm1281, %v256, %v558
        %v1305 = vsel %vm1281, %v257, %v560
        %v1306 = vsel %vm1281, %v259, %v562
        %v1307 = vsel %vm1281, %v260, %v564
        %v1308 = vsel %vm1281, %v262, %v566
        %v1309 = vsel %vm1281, %v263, %v568
        %v1310 = vsel %vm1281, %v265, %v570
        %v1311 = vsel %vm1281, %v266, %v572
        %v1312 = vsel %vm1281, %v268, %v574
        %v1313 = vsel %vm1281, %v269, %v576
        %vm1314 = vcmask 48128
        %v1315 = vsel %vm1314, %v1282, %v610
        %v1316 = vsel %vm1314, %v1283, %v612
        %v1317 = vsel %vm1314, %v1284, %v614
        %v1318 = vsel %vm1314, %v1285, %v616
        %v1319 = vsel %vm1314, %v1286, %v618
        %v1320 = vsel %vm1314, %v1287, %v620
        %v1321 = vsel %vm1314, %v1288, %v622
        %v1322 = vsel %vm1314, %v1289, %v624
        %v1323 = vsel %vm1314, %v1290, %v626
        %v1324 = vsel %vm1314, %v1291, %v628
        %v1325 = vsel %vm1314, %v1292, %v630
        %v1326 = vsel %vm1314, %v1293, %v632
        %v1327 = vsel %vm1314, %v1294, %v634
        %v1328 = vsel %vm1314, %v1295, %v636
        %v1329 = vsel %vm1314, %v1296, %v638
        %v1330 = vsel %vm1314, %v1297, %v640
        %v1331 = vsel %vm1314, %v1298, %v642
        %v1332 = vsel %vm1314, %v1299, %v644
        %v1333 = vsel %vm1314, %v1300, %v646
        %v1334 = vsel %vm1314, %v1301, %v648
        %v1335 = vsel %vm1314, %v1302, %v650
        %v1336 = vsel %vm1314, %v1303, %v652
        %v1337 = vsel %vm1314, %v1304, %v654
        %v1338 = vsel %vm1314, %v1305, %v656
        %v1339 = vsel %vm1314, %v1306, %v658
        %v1340 = vsel %vm1314, %v1307, %v660
        %v1341 = vsel %vm1314, %v1308, %v662
        %v1342 = vsel %vm1314, %v1309, %v664
        %v1343 = vsel %vm1314, %v1310, %v666
        %v1344 = vsel %vm1314, %v1311, %v668
        %v1345 = vsel %vm1314, %v1312, %v670
        %v1346 = vsel %vm1314, %v1313, %v672
        %vm1347 = vcmask 72704
        %v1348 = vsel %vm1347, %v1315, %v706
        %v1349 = vsel %vm1347, %v1316, %v708
        %v1350 = vsel %vm1347, %v1317, %v710
        %v1351 = vsel %vm1347, %v1318, %v712
        %v1352 = vsel %vm1347, %v1319, %v714
        %v1353 = vsel %vm1347, %v1320, %v716
        %v1354 = vsel %vm1347, %v1321, %v718
        %v1355 = vsel %vm1347, %v1322, %v720
        %v1356 = vsel %vm1347, %v1323, %v722
        %v1357 = vsel %vm1347, %v1324, %v724
        %v1358 = vsel %vm1347, %v1325, %v726
        %v1359 = vsel %vm1347, %v1326, %v728
        %v1360 = vsel %vm1347, %v1327, %v730
        %v1361 = vsel %vm1347, %v1328, %v732
        %v1362 = vsel %vm1347, %v1329, %v734
        %v1363 = vsel %vm1347, %v1330, %v736
        %v1364 = vsel %vm1347, %v1331, %v738
        %v1365 = vsel %vm1347, %v1332, %v740
        %v1366 = vsel %vm1347, %v1333, %v742
        %v1367 = vsel %vm1347, %v1334, %v744
        %v1368 = vsel %vm1347, %v1335, %v746
        %v1369 = vsel %vm1347, %v1336, %v748
        %v1370 = vsel %vm1347, %v1337, %v750
        %v1371 = vsel %vm1347, %v1338, %v752
        %v1372 = vsel %vm1347, %v1339, %v754
        %v1373 = vsel %vm1347, %v1340, %v756
        %v1374 = vsel %vm1347, %v1341, %v758
        %v1375 = vsel %vm1347, %v1342, %v760
        %v1376 = vsel %vm1347, %v1343, %v762
        %v1377 = vsel %vm1347, %v1344, %v764
        %v1378 = vsel %vm1347, %v1345, %v766
        %v1379 = vsel %vm1347, %v1346, %v768
        %vm1380 = vcmask 97280
        %v1381 = vsel %vm1380, %v1348, %v802
        %v1382 = vsel %vm1380, %v1349, %v804
        %v1383 = vsel %vm1380, %v1350, %v806
        %v1384 = vsel %vm1380, %v1351, %v808
        %v1385 = vsel %vm1380, %v1352, %v810
        %v1386 = vsel %vm1380, %v1353, %v812
        %v1387 = vsel %vm1380, %v1354, %v814
        %v1388 = vsel %vm1380, %v1355, %v816
        %v1389 = vsel %vm1380, %v1356, %v818
        %v1390 = vsel %vm1380, %v1357, %v820
        %v1391 = vsel %vm1380, %v1358, %v822
        %v1392 = vsel %vm1380, %v1359, %v824
        %v1393 = vsel %vm1380, %v1360, %v826
        %v1394 = vsel %vm1380, %v1361, %v828
        %v1395 = vsel %vm1380, %v1362, %v830
        %v1396 = vsel %vm1380, %v1363, %v832
        %v1397 = vsel %vm1380, %v1364, %v834
        %v1398 = vsel %vm1380, %v1365, %v836
        %v1399 = vsel %vm1380, %v1366, %v838
        %v1400 = vsel %vm1380, %v1367, %v840
        %v1401 = vsel %vm1380, %v1368, %v842
        %v1402 = vsel %vm1380, %v1369, %v844
        %v1403 = vsel %vm1380, %v1370, %v846
        %v1404 = vsel %vm1380, %v1371, %v848
        %v1405 = vsel %vm1380, %v1372, %v850
        %v1406 = vsel %vm1380, %v1373, %v852
        %v1407 = vsel %vm1380, %v1374, %v854
        %v1408 = vsel %vm1380, %v1375, %v856
        %v1409 = vsel %vm1380, %v1376, %v858
        %v1410 = vsel %vm1380, %v1377, %v860
        %v1411 = vsel %vm1380, %v1378, %v862
        %v1412 = vsel %vm1380, %v1379, %v864
        %vm1413 = vcmask 121856
        %v1414 = vsel %vm1413, %v1381, %v898
        %v1415 = vsel %vm1413, %v1382, %v900
        %v1416 = vsel %vm1413, %v1383, %v902
        %v1417 = vsel %vm1413, %v1384, %v904
        %v1418 = vsel %vm1413, %v1385, %v906
        %v1419 = vsel %vm1413, %v1386, %v908
        %v1420 = vsel %vm1413, %v1387, %v910
        %v1421 = vsel %vm1413, %v1388, %v912
        %v1422 = vsel %vm1413, %v1389, %v914
        %v1423 = vsel %vm1413, %v1390, %v916
        %v1424 = vsel %vm1413, %v1391, %v918
        %v1425 = vsel %vm1413, %v1392, %v920
        %v1426 = vsel %vm1413, %v1393, %v922
        %v1427 = vsel %vm1413, %v1394, %v924
        %v1428 = vsel %vm1413, %v1395, %v926
        %v1429 = vsel %vm1413, %v1396, %v928
        %v1430 = vsel %vm1413, %v1397, %v930
        %v1431 = vsel %vm1413, %v1398, %v932
        %v1432 = vsel %vm1413, %v1399, %v934
        %v1433 = vsel %vm1413, %v1400, %v936
        %v1434 = vsel %vm1413, %v1401, %v938
        %v1435 = vsel %vm1413, %v1402, %v940
        %v1436 = vsel %vm1413, %v1403, %v942
        %v1437 = vsel %vm1413, %v1404, %v944
        %v1438 = vsel %vm1413, %v1405, %v946
        %v1439 = vsel %vm1413, %v1406, %v948
        %v1440 = vsel %vm1413, %v1407, %v950
        %v1441 = vsel %vm1413, %v1408, %v952
        %v1442 = vsel %vm1413, %v1409, %v954
        %v1443 = vsel %vm1413, %v1410, %v956
        %v1444 = vsel %vm1413, %v1411, %v958
        %v1445 = vsel %vm1413, %v1412, %v960
        %vm1446 = vcmask 146432
        %v1447 = vsel %vm1446, %v1414, %v994
        %v1448 = vsel %vm1446, %v1415, %v996
        %v1449 = vsel %vm1446, %v1416, %v998
        %v1450 = vsel %vm1446, %v1417, %v1000
        %v1451 = vsel %vm1446, %v1418, %v1002
        %v1452 = vsel %vm1446, %v1419, %v1004
        %v1453 = vsel %vm1446, %v1420, %v1006
        %v1454 = vsel %vm1446, %v1421, %v1008
        %v1455 = vsel %vm1446, %v1422, %v1010
        %v1456 = vsel %vm1446, %v1423, %v1012
        %v1457 = vsel %vm1446, %v1424, %v1014
        %v1458 = vsel %vm1446, %v1425, %v1016
        %v1459 = vsel %vm1446, %v1426, %v1018
        %v1460 = vsel %vm1446, %v1427, %v1020
        %v1461 = vsel %vm1446, %v1428, %v1022
        %v1462 = vsel %vm1446, %v1429, %v1024
        %v1463 = vsel %vm1446, %v1430, %v1026
        %v1464 = vsel %vm1446, %v1431, %v1028
        %v1465 = vsel %vm1446, %v1432, %v1030
        %v1466 = vsel %vm1446, %v1433, %v1032
        %v1467 = vsel %vm1446, %v1434, %v1034
        %v1468 = vsel %vm1446, %v1435, %v1036
        %v1469 = vsel %vm1446, %v1436, %v1038
        %v1470 = vsel %vm1446, %v1437, %v1040
        %v1471 = vsel %vm1446, %v1438, %v1042
        %v1472 = vsel %vm1446, %v1439, %v1044
        %v1473 = vsel %vm1446, %v1440, %v1046
        %v1474 = vsel %vm1446, %v1441, %v1048
        %v1475 = vsel %vm1446, %v1442, %v1050
        %v1476 = vsel %vm1446, %v1443, %v1052
        %v1477 = vsel %vm1446, %v1444, %v1054
        %v1478 = vsel %vm1446, %v1445, %v1056
        %vm1479 = vcmask 171008
        %v1480 = vsel %vm1479, %v1447, %v1090
        %v1481 = vsel %vm1479, %v1448, %v1092
        %v1482 = vsel %vm1479, %v1449, %v1094
        %v1483 = vsel %vm1479, %v1450, %v1096
        %v1484 = vsel %vm1479, %v1451, %v1098
        %v1485 = vsel %vm1479, %v1452, %v1100
        %v1486 = vsel %vm1479, %v1453, %v1102
        %v1487 = vsel %vm1479, %v1454, %v1104
        %v1488 = vsel %vm1479, %v1455, %v1106
        %v1489 = vsel %vm1479, %v1456, %v1108
        %v1490 = vsel %vm1479, %v1457, %v1110
        %v1491 = vsel %vm1479, %v1458, %v1112
        %v1492 = vsel %vm1479, %v1459, %v1114
        %v1493 = vsel %vm1479, %v1460, %v1116
        %v1494 = vsel %vm1479, %v1461, %v1118
        %v1495 = vsel %vm1479, %v1462, %v1120
        %v1496 = vsel %vm1479, %v1463, %v1122
        %v1497 = vsel %vm1479, %v1464, %v1124
        %v1498 = vsel %vm1479, %v1465, %v1126
        %v1499 = vsel %vm1479, %v1466, %v1128
        %v1500 = vsel %vm1479, %v1467, %v1130
        %v1501 = vsel %vm1479, %v1468, %v1132
        %v1502 = vsel %vm1479, %v1469, %v1134
        %v1503 = vsel %vm1479, %v1470, %v1136
        %v1504 = vsel %vm1479, %v1471, %v1138
        %v1505 = vsel %vm1479, %v1472, %v1140
        %v1506 = vsel %vm1479, %v1473, %v1142
        %v1507 = vsel %vm1479, %v1474, %v1144
        %v1508 = vsel %vm1479, %v1475, %v1146
        %v1509 = vsel %vm1479, %v1476, %v1148
        %v1510 = vsel %vm1479, %v1477, %v1150
        %v1511 = vsel %vm1479, %v1478, %v1152
        %vm1512 = vcmask 195584
        %v1513 = vsel %vm1512, %v1480, %v1186
        %v1514 = vsel %vm1512, %v1481, %v1188
        %v1515 = vsel %vm1512, %v1482, %v1190
        %v1516 = vsel %vm1512, %v1483, %v1192
        %v1517 = vsel %vm1512, %v1484, %v1194
        %v1518 = vsel %vm1512, %v1485, %v1196
        %v1519 = vsel %vm1512, %v1486, %v1198
        %v1520 = vsel %vm1512, %v1487, %v1200
        %v1521 = vsel %vm1512, %v1488, %v1202
        %v1522 = vsel %vm1512, %v1489, %v1204
        %v1523 = vsel %vm1512, %v1490, %v1206
        %v1524 = vsel %vm1512, %v1491, %v1208
        %v1525 = vsel %vm1512, %v1492, %v1210
        %v1526 = vsel %vm1512, %v1493, %v1212
        %v1527 = vsel %vm1512, %v1494, %v1214
        %v1528 = vsel %vm1512, %v1495, %v1216
        %v1529 = vsel %vm1512, %v1496, %v1218
        %v1530 = vsel %vm1512, %v1497, %v1220
        %v1531 = vsel %vm1512, %v1498, %v1222
        %v1532 = vsel %vm1512, %v1499, %v1224
        %v1533 = vsel %vm1512, %v1500, %v1226
        %v1534 = vsel %vm1512, %v1501, %v1228
        %v1535 = vsel %vm1512, %v1502, %v1230
        %v1536 = vsel %vm1512, %v1503, %v1232
        %v1537 = vsel %vm1512, %v1504, %v1234
        %v1538 = vsel %vm1512, %v1505, %v1236
        %v1539 = vsel %vm1512, %v1506, %v1238
        %v1540 = vsel %vm1512, %v1507, %v1240
        %v1541 = vsel %vm1512, %v1508, %v1242
        %v1542 = vsel %vm1512, %v1509, %v1244
        %v1543 = vsel %vm1512, %v1510, %v1246
        %v1544 = vsel %vm1512, %v1511, %v1248
        %v1545 = vpack.c.bf16 %v1514, %v1513
        %v1546 = vpack.c.bf16 %v1516, %v1515
        %v1547 = vpack.c.bf16 %v1518, %v1517
        %v1548 = vpack.c.bf16 %v1520, %v1519
        %v1549 = vpack.c.bf16 %v1522, %v1521
        %v1550 = vpack.c.bf16 %v1524, %v1523
        %v1551 = vpack.c.bf16 %v1526, %v1525
        %v1552 = vpack.c.bf16 %v1528, %v1527
        %v1553 = vpack.c.bf16 %v1530, %v1529
        %v1554 = vpack.c.bf16 %v1532, %v1531
        %v1555 = vpack.c.bf16 %v1534, %v1533
        %v1556 = vpack.c.bf16 %v1536, %v1535
        %v1557 = vpack.c.bf16 %v1538, %v1537
        %v1558 = vpack.c.bf16 %v1540, %v1539
        %v1559 = vpack.c.bf16 %v1542, %v1541
        %v1560 = vpack.c.bf16 %v1544, %v1543
        %v1561 = vld [vmem:[%s1] sm:$0xf]
        %v1562 = vld [vmem:[%s1 + $0x4] sm:$0xf]
        %v1563 = vld [vmem:[%s1 + $0x8] sm:$0xf]
        %v1564 = vld [vmem:[%s1 + $0xc] sm:$0x3]
        %v1565 = vld [vmem:[%s2] sm:$0x1]
        %v1567 = vperm.slane %v1565, 0
        %v1573 = vunpack.c.l.b16 %v1561
        %v1574 = vunpack.c.l.b16 %v1562
        %v1575 = vunpack.c.l.b16 %v1563
        %v1576 = vunpack.c.l.b16 %v1564
        %v1577 = vpack.c.b16 %v1574, %v1573
        %v1578 = vpack.c.b16 %v1576, %v1575
        %vm1580 = vcmask 220160
        %v1582 = vsel %vm1580, %v1545, 0
        %v1585 = vsel %vm1580, %v1546, 0
        %v1588 = vsel %vm1580, %v1547, 0
        %v1591 = vsel %vm1580, %v1548, 0
        %v1594 = vsel %vm1580, %v1549, 0
        %v1597 = vsel %vm1580, %v1550, 0
        %v1600 = vsel %vm1580, %v1551, 0
        %v1603 = vsel %vm1580, %v1552, 0
        %v1606 = vsel %vm1580, %v1553, 0
        %v1609 = vsel %vm1580, %v1554, 0
        %v1612 = vsel %vm1580, %v1555, 0
        %v1615 = vsel %vm1580, %v1556, 0
        %v1618 = vsel %vm1580, %v1557, 0
        %v1621 = vsel %vm1580, %v1558, 0
        %v1624 = vsel %vm1580, %v1559, 0
        %v1627 = vsel %vm1580, %v1560, 0
        %vm1629 = vcmask 1044480
        %v1630 = vsel %vm1629, 4294967295, 65535
        %v1631 = vsel %vm406, %v1630, 0
        %v1633 = vand.u32 %v1578, %v1631
        %1635 = vmatpush.bf16.msra.mxu0 0
        %1636 = vmatpush.bf16.msra.mxu0 0
        %1637 = vmatpush.bf16.msra.mxu0 0
        %1638 = vmatpush.bf16.msra.mxu0 0
        %1639 = vmatpush.bf16.msra.mxu0 0
        %1640 = vmatpush.bf16.msra.mxu0 0
        %1641 = vmatpush.bf16.msra.mxu0 %v1633
        %1642 = vmatpush.bf16.msra.mxu0 %v1577
        %1643 = vmatmul.bf16.gmra.mxu0 %v1582
        %v1644 = vpop.f32.mrf.mxu0
        %v1645 = vadd.f32 %v1567, %v1644
        %v1646 = vpop.f32.mrf.mxu0
        %v1647 = vadd.f32 %v1567, %v1646
        %1648 = vmatmul.bf16.gmra.mxu0 %v1585
        %v1649 = vpop.f32.mrf.mxu0
        %v1650 = vadd.f32 %v1567, %v1649
        %v1651 = vpop.f32.mrf.mxu0
        %v1652 = vadd.f32 %v1567, %v1651
        %1653 = vmatmul.bf16.gmra.mxu0 %v1588
        %v1654 = vpop.f32.mrf.mxu0
        %v1655 = vadd.f32 %v1567, %v1654
        %v1656 = vpop.f32.mrf.mxu0
        %v1657 = vadd.f32 %v1567, %v1656
        %1658 = vmatmul.bf16.gmra.mxu0 %v1591
        %v1659 = vpop.f32.mrf.mxu0
        %v1660 = vadd.f32 %v1567, %v1659
        %v1661 = vpop.f32.mrf.mxu0
        %v1662 = vadd.f32 %v1567, %v1661
        %1663 = vmatmul.bf16.gmra.mxu0 %v1594
        %v1664 = vpop.f32.mrf.mxu0
        %v1665 = vadd.f32 %v1567, %v1664
        %v1666 = vpop.f32.mrf.mxu0
        %v1667 = vadd.f32 %v1567, %v1666
        %1668 = vmatmul.bf16.gmra.mxu0 %v1597
        %v1669 = vpop.f32.mrf.mxu0
        %v1670 = vadd.f32 %v1567, %v1669
        %v1671 = vpop.f32.mrf.mxu0
        %v1672 = vadd.f32 %v1567, %v1671
        %1673 = vmatmul.bf16.gmra.mxu0 %v1600
        %v1674 = vpop.f32.mrf.mxu0
        %v1675 = vadd.f32 %v1567, %v1674
        %v1676 = vpop.f32.mrf.mxu0
        %v1677 = vadd.f32 %v1567, %v1676
        %1678 = vmatmul.bf16.gmra.mxu0 %v1603
        %v1679 = vpop.f32.mrf.mxu0
        %v1680 = vadd.f32 %v1567, %v1679
        %v1681 = vpop.f32.mrf.mxu0
        %v1682 = vadd.f32 %v1567, %v1681
        %1683 = vmatmul.bf16.gmra.mxu0 %v1606
        %v1684 = vpop.f32.mrf.mxu0
        %v1685 = vadd.f32 %v1567, %v1684
        %v1686 = vpop.f32.mrf.mxu0
        %v1687 = vadd.f32 %v1567, %v1686
        %1688 = vmatmul.bf16.gmra.mxu0 %v1609
        %v1689 = vpop.f32.mrf.mxu0
        %v1690 = vadd.f32 %v1567, %v1689
        %v1691 = vpop.f32.mrf.mxu0
        %v1692 = vadd.f32 %v1567, %v1691
        %1693 = vmatmul.bf16.gmra.mxu0 %v1612
        %v1694 = vpop.f32.mrf.mxu0
        %v1695 = vadd.f32 %v1567, %v1694
        %v1696 = vpop.f32.mrf.mxu0
        %v1697 = vadd.f32 %v1567, %v1696
        %1698 = vmatmul.bf16.gmra.mxu0 %v1615
        %v1699 = vpop.f32.mrf.mxu0
        %v1700 = vadd.f32 %v1567, %v1699
        %v1701 = vpop.f32.mrf.mxu0
        %v1702 = vadd.f32 %v1567, %v1701
        %1703 = vmatmul.bf16.gmra.mxu0 %v1618
        %v1704 = vpop.f32.mrf.mxu0
        %v1705 = vadd.f32 %v1567, %v1704
        %v1706 = vpop.f32.mrf.mxu0
        %v1707 = vadd.f32 %v1567, %v1706
        %1708 = vmatmul.bf16.gmra.mxu0 %v1621
        %v1709 = vpop.f32.mrf.mxu0
        %v1710 = vadd.f32 %v1567, %v1709
        %v1711 = vpop.f32.mrf.mxu0
        %v1712 = vadd.f32 %v1567, %v1711
        %1713 = vmatmul.bf16.gmra.mxu0 %v1624
        %v1714 = vpop.f32.mrf.mxu0
        %v1715 = vadd.f32 %v1567, %v1714
        %v1716 = vpop.f32.mrf.mxu0
        %v1717 = vadd.f32 %v1567, %v1716
        %1718 = vmatmul.bf16.gmra.mxu0 %v1627
        %v1719 = vpop.f32.mrf.mxu0
        %v1720 = vadd.f32 %v1567, %v1719
        %v1721 = vpop.f32.mrf.mxu0
        %v1722 = vadd.f32 %v1567, %v1721
        %1723 = vdwg.mxu0
        %v1724 = vmax.f32 %v1645, 0.0
        %v1725 = vmax.f32 %v1647, 0.0
        %v1726 = vmax.f32 %v1650, 0.0
        %v1727 = vmax.f32 %v1652, 0.0
        %v1728 = vmax.f32 %v1655, 0.0
        %v1729 = vmax.f32 %v1657, 0.0
        %v1730 = vmax.f32 %v1660, 0.0
        %v1731 = vmax.f32 %v1662, 0.0
        %v1732 = vmax.f32 %v1665, 0.0
        %v1733 = vmax.f32 %v1667, 0.0
        %v1734 = vmax.f32 %v1670, 0.0
        %v1735 = vmax.f32 %v1672, 0.0
        %v1736 = vmax.f32 %v1675, 0.0
        %v1737 = vmax.f32 %v1677, 0.0
        %v1738 = vmax.f32 %v1680, 0.0
        %v1739 = vmax.f32 %v1682, 0.0
        %v1740 = vmax.f32 %v1685, 0.0
        %v1741 = vmax.f32 %v1687, 0.0
        %v1742 = vmax.f32 %v1690, 0.0
        %v1743 = vmax.f32 %v1692, 0.0
        %v1744 = vmax.f32 %v1695, 0.0
        %v1745 = vmax.f32 %v1697, 0.0
        %v1746 = vmax.f32 %v1700, 0.0
        %v1747 = vmax.f32 %v1702, 0.0
        %v1748 = vmax.f32 %v1705, 0.0
        %v1749 = vmax.f32 %v1707, 0.0
        %v1750 = vmax.f32 %v1710, 0.0
        %v1751 = vmax.f32 %v1712, 0.0
        %v1752 = vmax.f32 %v1715, 0.0
        %v1753 = vmax.f32 %v1717, 0.0
        %v1754 = vmax.f32 %v1720, 0.0
        %v1755 = vmax.f32 %v1722, 0.0
        %vm1756 = vcmask 64512
        %v1757 = vsel %vm1756, %v1724, 0.0
        %v1758 = vsel %vm1756, %v1725, 0.0
        %v1759 = vadd.f32 %v1757, %v1758
        %v1760 = vsel %vm1756, %v1726, 0.0
        %v1761 = vadd.f32 %v1759, %v1760
        %v1762 = vsel %vm1756, %v1727, 0.0
        %v1763 = vadd.f32 %v1761, %v1762
        %v1764 = vsel %vm1756, %v1728, 0.0
        %v1765 = vadd.f32 %v1763, %v1764
        %v1766 = vsel %vm1756, %v1729, 0.0
        %v1767 = vadd.f32 %v1765, %v1766
        %v1768 = vsel %vm1756, %v1730, 0.0
        %v1769 = vadd.f32 %v1767, %v1768
        %v1770 = vsel %vm1756, %v1731, 0.0
        %v1771 = vadd.f32 %v1769, %v1770
        %v1772 = vsel %vm1756, %v1732, 0.0
        %v1773 = vadd.f32 %v1771, %v1772
        %v1774 = vsel %vm1756, %v1733, 0.0
        %v1775 = vadd.f32 %v1773, %v1774
        %v1776 = vsel %vm1756, %v1734, 0.0
        %v1777 = vadd.f32 %v1775, %v1776
        %v1778 = vsel %vm1756, %v1735, 0.0
        %v1779 = vadd.f32 %v1777, %v1778
        %v1780 = vsel %vm1756, %v1736, 0.0
        %v1781 = vadd.f32 %v1779, %v1780
        %v1782 = vsel %vm1756, %v1737, 0.0
        %v1783 = vadd.f32 %v1781, %v1782
        %v1784 = vsel %vm1756, %v1738, 0.0
        %v1785 = vadd.f32 %v1783, %v1784
        %v1786 = vsel %vm1756, %v1739, 0.0
        %v1787 = vadd.f32 %v1785, %v1786
        %v1788 = vsel %vm1756, %v1740, 0.0
        %v1789 = vadd.f32 %v1787, %v1788
        %v1790 = vsel %vm1756, %v1741, 0.0
        %v1791 = vadd.f32 %v1789, %v1790
        %v1792 = vsel %vm1756, %v1742, 0.0
        %v1793 = vadd.f32 %v1791, %v1792
        %v1794 = vsel %vm1756, %v1743, 0.0
        %v1795 = vadd.f32 %v1793, %v1794
        %v1796 = vsel %vm1756, %v1744, 0.0
        %v1797 = vadd.f32 %v1795, %v1796
        %v1798 = vsel %vm1756, %v1745, 0.0
        %v1799 = vadd.f32 %v1797, %v1798
        %v1800 = vsel %vm1756, %v1746, 0.0
        %v1801 = vadd.f32 %v1799, %v1800
        %v1802 = vsel %vm1756, %v1747, 0.0
        %v1803 = vadd.f32 %v1801, %v1802
        %v1804 = vsel %vm1756, %v1748, 0.0
        %v1805 = vadd.f32 %v1803, %v1804
        %v1806 = vsel %vm1756, %v1749, 0.0
        %v1807 = vadd.f32 %v1805, %v1806
        %v1808 = vsel %vm1756, %v1750, 0.0
        %v1809 = vadd.f32 %v1807, %v1808
        %v1810 = vsel %vm1756, %v1751, 0.0
        %v1811 = vadd.f32 %v1809, %v1810
        %v1812 = vsel %vm1756, %v1752, 0.0
        %v1813 = vadd.f32 %v1811, %v1812
        %v1814 = vsel %vm1756, %v1753, 0.0
        %v1815 = vadd.f32 %v1813, %v1814
        %v1816 = vsel %vm1756, %v1754, 0.0
        %v1817 = vadd.f32 %v1815, %v1816
        %v1818 = vsel %vm1756, %v1755, 0.0
        %v1819 = vadd.f32 %v1817, %v1818
        %v1820 = vrot.slane %v1819, 4
        %v1821 = vadd.f32 %v1819, %v1820
        %v1822 = vrot.slane %v1821, 2
        %v1823 = vadd.f32 %v1821, %v1822
        %v1824 = vrot.slane %v1823, 1
        %v1825 = vadd.f32 %v1823, %v1824
        %v1826 = vrcp.pop 256.0
        %v1827 = vmul.f32 256.0, %v1826
        %v1828 = vsub.f32 1.0, %v1827
        %v1829 = vmul.f32 %v1826, %v1828
        %v1830 = vadd.f32 %v1826, %v1829
        %vm1831 = vweird.f32 %v1826
        %v1832 = vsel %vm1831, %v1826, %v1830
        %v1833 = vmul.f32 %v1825, %v1832
        %v1834 = vpack.c.bf16 %v1833, %v1833
        %v1835 = vld [vmem:[%s3] sm:$0xf]
        %v1836 = vld [vmem:[%s4] sm:$0x1]
        %v1838 = vsel %vm1756, %v1834, 0
        %vm1840 = vcmask 1043456
        %v1842 = vsel %vm1840, %v1835, 0
        %1844 = vmatpush.bf16.msra.mxu0 0
        %1845 = vmatpush.bf16.msra.mxu0 0
        %1846 = vmatpush.bf16.msra.mxu0 0
        %1847 = vmatpush.bf16.msra.mxu0 0
        %1848 = vmatpush.bf16.msra.mxu0 0
        %1849 = vmatpush.bf16.msra.mxu0 0
        %1850 = vmatpush.bf16.msra.mxu0 0
        %1851 = vmatpush.bf16.msra.mxu0 %v1842
        %1852 = vmatmul.bf16.gmra.mxu0 %v1838
        %v1853 = vpop.f32.mrf.mxu0
        %v1854 = vadd.f32 %v1836, %v1853
        %v1855 = vpop.f32.mrf.mxu0
        %1856 = vdwg.mxu0
        %vm1857 = vcmask 253952
        %1858 = vst.msk [vmem:[%s216] sm:$0x1] %vm1857, %v1854
        %s1859 = sand.u32 %s137, 1
        %s1860 = scalar_lea.sflag [#allocation3], %s1859
        %s1861 = sand.u32 %s137, 1
        %s1862 = scalar_lea.vmem [#allocation2], %s1861
        // Predicated region
        $region41: #{tpu_custom_call.1} parent=39 // pred_check
          %p1863 = pneg %p147
        $region42: #{tpu_custom_call.1} parent=39 // pred_check_branch
          %1865 = sbr.rel (%p1863) target = $region44
        $region43: #{tpu_custom_call.1} parent=39 // pred_region
          %1867 = vsyncadd %s1860, 0
          %s1868 = scalar_lea.hbm %s5, %s19
          %s1870 = sshll.u32 %s1862, 4
          %s1871 = int_to_ptr.vmem [resolvable:$true] %s1870
          %s1872 = sshll.u32 %s1868, 4
          %s1873 = int_to_ptr.hbm [resolvable:$true] %s1872
          %1875 = dma.vmem_to_hbm [thread:$0]  %s1871, 16, %s1873, %s1860
        $region44: #{tpu_custom_call.1} parent=39 // pred_fallthru
          _
      $region40: #{tpu_custom_call.1} parent=5 // pred_fallthru
        _
      %p1876 = scmp.le.s32.totalorder 2, %s14
      // Predicated region
      $region45: #{tpu_custom_call.1} parent=5 // pred_check
        %p1877 = pneg %p1876
      $region46: #{tpu_custom_call.1} parent=5 // pred_check_branch
        %1879 = sbr.rel (%p1877) target = $region48
      $region47: #{tpu_custom_call.1} parent=5 // pred_region
        %s1880 = ssub.s32 %s14, 2
        // Predicated region
        $region49: #{tpu_custom_call.1} parent=47 // pred_check
          %p1881 = pneg %p153
        $region50: #{tpu_custom_call.1} parent=47 // pred_check_branch
          %1883 = sbr.rel (%p1881) target = $region52
        $region51: #{tpu_custom_call.1} parent=47 // pred_region
          %s1884 = sand.u32 %s138, 1
          %s1885 = scalar_lea.sflag [#allocation3], %s1884
          %s1886 = sand.u32 %s138, 1
          %s1887 = scalar_lea.vmem [#allocation2], %s1886
          %1889 = dma.done %s1885, 16
        $region52: #{tpu_custom_call.1} parent=47 // pred_fallthru
          _
      $region48: #{tpu_custom_call.1} parent=5 // pred_fallthru
        _
    $region6: #{tpu_custom_call.1} parent=1 // loop_footer
      %s18 = sadd.s32 1, %s14
    $region7: #{tpu_custom_call.1} parent=1 // loop_footer_branch
      %13 = sbr.rel target = $region3
    $region8: #{tpu_custom_call.1} parent=1 // loop_exit
      _
    %1890 = vsyncpa [#allocation3], 1
    %s1891 = scalar_lea.sflag [#allocation3], 1
    %1892 = vsyncpa %s1891, 1

</llo_original>
